<compile_context>
chip_gen: v7x
topology: tpu7x:2x2x1
jax: 0.10.0
libtpu: 0.0.40
codegen_flags: <defaults>
</compile_context>

<pallas_src>
import functools

import jax
import jax.numpy as jnp
from jax.experimental import pallas as pl
from jax.experimental.pallas import tpu as pltpu


LPAD = 128  # lane halo on each side of the flattened spatial axis (>= W+1, multiple of 128)


def _round_up(n, m):
    return ((n + m - 1) // m) * m


def _fused_net_kernel(x_ref, m_ref, mask_ref, w1_ref, b1_ref, w2_ref, b2_ref,
                      o_ref, xbuf, stack1, hbuf, stack2,
                      *, H, W, Bt, cx, cm, cin_p, cmid_p):
    """One batch-tile per grid step: fused conv3x3+LeakyReLU+conv3x3+tanh.

    Layout: activations are (C, Bt*H*W) -- channels in sublanes, batch-folded
    flattened spatial axis in lanes (lane-dense). xbuf/hbuf are lane-padded by
    LPAD on each side so every 3x3 tap is a static lane-shifted slice.
    """
    HW = H * W
    N = Bt * HW
    cin = cx + cm
    op_dtype = xbuf.dtype

    # ---- load this step's Bt images into the lane-folded input buffer -------
    # Single f32->bf16 cast per element; the interior is fully overwritten
    # every step, so no full-buffer zero-fill is needed.
    for bi in range(Bt):
        lo = LPAD + bi * HW
        xbuf[0:cx, lo:lo + HW] = x_ref[bi].astype(op_dtype)
        xbuf[cx:cin, lo:lo + HW] = m_ref[bi].astype(op_dtype)
    if cin_p > cin:
        # Padded input-channel rows meet zero weight columns in the MXU, but
        # must not hold NaN/Inf garbage (0*Inf = NaN), so keep them zeroed.
        xbuf[cin:cin_p, :] = jnp.zeros((cin_p - cin, N + 2 * LPAD), op_dtype)

    taps = [(ky - 1, kx - 1) for ky in range(3) for kx in range(3)]
    # Grid-invariant SAME-padding / cross-image validity masks (resident input).
    # Applied as a select, so halo / wrapped-lane garbage never reaches math.
    mrows = [mask_ref[t:t + 1, :] > 0.5 for t in range(9)]

    # ---- conv1: lane-shifted im2col stack -> single bf16 MXU matmul ---------
    for t, (dy, dx) in enumerate(taps):
        off = dy * W + dx
        sh = xbuf[:, LPAD + off:LPAD + off + N]               # (cin_p, N) bf16
        stack1[t * cin_p:(t + 1) * cin_p, :] = jnp.where(
            mrows[t], sh, jnp.zeros_like(sh))

    h = jnp.dot(w1_ref[...], stack1[...],                     # (cmid_p, N) f32
                preferred_element_type=jnp.float32)
    h = h + b1_ref[...]
    h = jnp.maximum(h, 0.2 * h)                               # LeakyReLU(0.2)
    # Padded rows of h are exactly 0 (zero weight rows, zero bias, max(0,0)=0),
    # so conv2's padded input channels stay clean.
    hbuf[:, LPAD:LPAD + N] = h.astype(op_dtype)               # stays in VMEM

    # ---- conv2 on the VMEM-resident intermediate ----------------------------
    for t, (dy, dx) in enumerate(taps):
        off = dy * W + dx
        sh = hbuf[:, LPAD + off:LPAD + off + N]               # (cmid_p, N) bf16
        stack2[t * cmid_p:(t + 1) * cmid_p, :] = jnp.where(
            mrows[t], sh, jnp.zeros_like(sh))

    y = jnp.dot(w2_ref[...], stack2[...],                     # (cout_p, N) f32
                preferred_element_type=jnp.float32)
    y = jnp.tanh(y + b2_ref[...])

    # Emit the full cout_p channels with lane-aligned, unmasked stores;
    # the wrapper slices off the channel padding.
    for bi in range(Bt):
        o_ref[bi] = y[:, bi * HW:(bi + 1) * HW].astype(o_ref.dtype)


def _pack_conv_params(w_hwio, b, cin_pad, cout_pad, operand_dtype):
    """(3,3,Cin,Cout) HWIO -> (Cout_pad, 9*Cin_pad) bf16 slab + (Cout_pad,1) f32 bias."""
    kh, kw, cin, cout = w_hwio.shape
    wt = jnp.transpose(w_hwio, (3, 0, 1, 2))                  # (cout, kh, kw, cin)
    wt = jnp.pad(wt, ((0, cout_pad - cout), (0, 0), (0, 0), (0, cin_pad - cin)))
    w_mat = wt.reshape(cout_pad, kh * kw * cin_pad).astype(operand_dtype)
    b_col = jnp.pad(b, (0, cout_pad - cout)).reshape(cout_pad, 1).astype(jnp.float32)
    return w_mat, b_col


def _same_pad_masks(H, W, Bt):
    """(9, Bt*H*W) f32 {0,1}: tap validity per flattened (batch-folded) position."""
    q = jnp.arange(H * W, dtype=jnp.int32)
    hh = q // W
    ww = q - hh * W
    rows = []
    for dy in (-1, 0, 1):
        for dx in (-1, 0, 1):
            ok = ((hh + dy >= 0) & (hh + dy < H) &
                  (ww + dx >= 0) & (ww + dx < W))
            rows.append(ok)
    mask_hw = jnp.stack(rows, axis=0).astype(jnp.float32)     # (9, H*W)
    return jnp.tile(mask_hw, (1, Bt))                         # (9, Bt*H*W)


def fused_conv_net_pallas(x_nchw, m_nchw, params, sizes, *,
                          operand_dtype=jnp.bfloat16, batch_tile=None):
    """Fused 2-layer conv net. x_nchw: (B,Cx,H,W), m_nchw: (B,Cm,H,W).

    `sizes` must be static Python ints (the crop happens at trace time).
    """
    B, cx, H, W = x_nchw.shape
    cm = m_nchw.shape[1]
    HW = H * W
    assert W + 1 <= LPAD and LPAD % 128 == 0, "lane halo padding too small / unaligned"

    # Fold the whole batch into the lane axis of one grid step by default:
    # each conv becomes ONE matmul with N = Bt*HW lanes and the per-step
    # overhead is paid once.
    Bt = B if batch_tile is None else batch_tile
    assert B % Bt == 0, "batch_tile must divide the batch"
    steps = B // Bt
    N = Bt * HW

    cin = cx + cm
    cmid = params["w1"].shape[-1]
    cout = params["w2"].shape[-1]
    cin_p = _round_up(cin, 8)
    cmid_p = _round_up(cmid, 8)
    cout_p = _round_up(cout, 8)

    w1_mat, b1_col = _pack_conv_params(params["w1"], params["b1"],
                                       cin_p, cmid_p, operand_dtype)
    w2_mat, b2_col = _pack_conv_params(params["w2"], params["b2"],
                                       cmid_p, cout_p, operand_dtype)
    masks = _same_pad_masks(H, W, Bt)

    # NCHW -> (B, C, H*W): free reshapes; no pad / concat / transpose in HBM.
    x2 = x_nchw.reshape(B, cx, HW)
    m2 = m_nchw.reshape(B, cm, HW)

    kernel = functools.partial(_fused_net_kernel, H=H, W=W, Bt=Bt, cx=cx,
                               cm=cm, cin_p=cin_p, cmid_p=cmid_p)

    out_flat = pl.pallas_call(
        kernel,
        out_shape=jax.ShapeDtypeStruct((B, cout_p, HW), x_nchw.dtype),
        grid_spec=pltpu.PrefetchScalarGridSpec(
            num_scalar_prefetch=0,
            grid=(steps,),
            in_specs=[
                pl.BlockSpec((Bt, cx, HW), lambda g: (g, 0, 0)),
                pl.BlockSpec((Bt, cm, HW), lambda g: (g, 0, 0)),
                pl.BlockSpec((9, N), lambda g: (0, 0)),            # resident masks
                pl.BlockSpec((cmid_p, 9 * cin_p), lambda g: (0, 0)),
                pl.BlockSpec((cmid_p, 1), lambda g: (0, 0)),
                pl.BlockSpec((cout_p, 9 * cmid_p), lambda g: (0, 0)),
                pl.BlockSpec((cout_p, 1), lambda g: (0, 0)),
            ],
            out_specs=pl.BlockSpec((Bt, cout_p, HW), lambda g: (g, 0, 0)),
            scratch_shapes=[
                pltpu.VMEM((cin_p, N + 2 * LPAD), operand_dtype),   # padded input (bf16)
                pltpu.VMEM((9 * cin_p, N), operand_dtype),          # im2col stack 1
                pltpu.VMEM((cmid_p, N + 2 * LPAD), operand_dtype),  # padded hidden (bf16)
                pltpu.VMEM((9 * cmid_p, N), operand_dtype),         # im2col stack 2
            ],
        ),
        compiler_params=pltpu.CompilerParams(
            dimension_semantics=("parallel",)),
    )(x2, m2, masks, w1_mat, b1_col, w2_mat, b2_col)

    out = out_flat[:, :cout, :].reshape(B, cout, H, W)   # drop channel padding
    return out[:, :, :sizes[0], :sizes[1]]               # static crop to `sizes`


def make_synth_net(key, c_in_x, c_in_m, c_mid, c_out):
    """Deterministic parameter init for the synthetic inner net."""
    k1, k2, k3, k4 = jax.random.split(key, 4)
    cin = c_in_x + c_in_m
    params = {
        "w1": 0.1 * jax.random.normal(k1, (3, 3, cin, c_mid), jnp.float32),
        "b1": 0.01 * jax.random.normal(k2, (c_mid,), jnp.float32),
        "w2": 0.1 * jax.random.normal(k3, (3, 3, c_mid, c_out), jnp.float32),
        "b2": 0.01 * jax.random.normal(k4, (c_out,), jnp.float32),
    }

    def net(x_nchw, m_back_nchw, sizes):
        # `sizes` must be static Python ints for the crop to trace.
        return fused_conv_net_pallas(x_nchw, m_back_nchw, params, sizes)

    return net, params


class ParallelWorker:
    """JAX port of the PyTorch ParallelWorker wrapper (pure delegation)."""

    def __init__(self, net):
        self.net = net

    def __call__(self, x, m_back, sizes, training=True, identity=False):
        return self.net(x, m_back, sizes)


def _reference_net(params, x_nchw, m_back_nchw, sizes,
                   operand_dtype=jnp.bfloat16):
    """Plain-JAX reference with the same numeric contract (bf16 operands,
    f32 accumulation) for a correctness sanity check."""
    x = jnp.transpose(x_nchw, (0, 2, 3, 1))
    m = jnp.transpose(m_back_nchw, (0, 2, 3, 1))
    hin = jnp.concatenate([x, m], axis=-1)

    def conv(inp, w, b):
        y = jax.lax.conv_general_dilated(
            inp.astype(operand_dtype), w.astype(operand_dtype),
            window_strides=(1, 1), padding="SAME",
            dimension_numbers=("NHWC", "HWIO", "NHWC"),
            preferred_element_type=jnp.float32)
        return y + b.reshape(1, 1, 1, -1)

    h = conv(hin, params["w1"], params["b1"])
    h = jnp.where(h > 0, h, 0.2 * h)
    out = jnp.tanh(conv(h, params["w2"], params["b2"]))
    out = out[:, :sizes[0], :sizes[1], :]
    return jnp.transpose(out, (0, 3, 1, 2))


if __name__ == "__main__":
    key = jax.random.PRNGKey(0)
    k_net, k_x, k_m = jax.random.split(key, 3)

    B, C, H, W = 2, 4, 16, 16          # x: image-like NCHW
    Cm = 1                             # m_back: single-channel backward mask
    C_mid, C_out = 8, 4

    x = jax.random.normal(k_x, (B, C, H, W), jnp.float32)
    m_back = jax.random.uniform(k_m, (B, Cm, H, W), jnp.float32)
    sizes = (H, W)

    net, params = make_synth_net(k_net, C, Cm, C_mid, C_out)
    worker = ParallelWorker(net)

    out = worker(x, m_back, sizes, training=True, identity=False)
    out = jax.block_until_ready(out)

    ref = jax.block_until_ready(_reference_net(params, x, m_back, sizes))
    assert out.shape == (B, C_out, sizes[0], sizes[1]), out.shape
    # bf16 MXU operands / f32 accumulation on both sides -> tight agreement.
    assert jnp.allclose(out, ref, atol=3e-3, rtol=1e-3), "mismatch vs reference"

    print("KERNEL_OK")
</pallas_src>

<mosaic_0001>
module attributes {stable_mosaic.version = 11 : i64} {
  func.func @_fused_net_kernel(%arg0: i32, %arg1: memref<2x4x256xf32, #tpu.memory_space<vmem>>, %arg2: memref<2x1x256xf32, #tpu.memory_space<vmem>>, %arg3: memref<9x512xf32, #tpu.memory_space<vmem>>, %arg4: memref<8x72xbf16, #tpu.memory_space<vmem>>, %arg5: memref<8x1xf32, #tpu.memory_space<vmem>>, %arg6: memref<8x72xbf16, #tpu.memory_space<vmem>>, %arg7: memref<8x1xf32, #tpu.memory_space<vmem>>, %arg8: memref<2x8x256xf32, #tpu.memory_space<vmem>>, %arg9: memref<8x768xbf16, #tpu.memory_space<vmem>>, %arg10: memref<72x512xbf16, #tpu.memory_space<vmem>>, %arg11: memref<8x768xbf16, #tpu.memory_space<vmem>>, %arg12: memref<72x512xbf16, #tpu.memory_space<vmem>>) attributes {dimension_semantics = [#tpu.dimension_semantics<parallel>], iteration_bounds = array<i64: 1>, scalar_prefetch = 0 : i64, scratch_operands = 4 : i64, tpu.core_type = #tpu.core_type<tc>, window_params = [{transform_indices = @transform_0, window_bounds = array<i64: 2, 4, 256>}, {transform_indices = @transform_1, window_bounds = array<i64: 2, 1, 256>}, {pipeline_mode = #tpu.pipeline_mode<synchronous>, transform_indices = @transform_2, window_bounds = array<i64: 9, 512>}, {pipeline_mode = #tpu.pipeline_mode<synchronous>, transform_indices = @transform_3, window_bounds = array<i64: 8, 72>}, {pipeline_mode = #tpu.pipeline_mode<synchronous>, transform_indices = @transform_4, window_bounds = array<i64: 8, 1>}, {pipeline_mode = #tpu.pipeline_mode<synchronous>, transform_indices = @transform_5, window_bounds = array<i64: 8, 72>}, {pipeline_mode = #tpu.pipeline_mode<synchronous>, transform_indices = @transform_6, window_bounds = array<i64: 8, 1>}, {transform_indices = @transform_7, window_bounds = array<i64: 2, 8, 256>}]} {
    %c0 = arith.constant 0 : index
    %c0_0 = arith.constant 0 : index
    %c0_1 = arith.constant 0 : index
    %0 = vector.load %arg1[%c0, %c0_0, %c0_1] : memref<2x4x256xf32, #tpu.memory_space<vmem>>, vector<1x4x256xf32>
    %1 = vector.shape_cast %0 : vector<1x4x256xf32> to vector<4x256xf32>
    %2 = arith.truncf %1 : vector<4x256xf32> to vector<4x256xbf16>
    %c0_2 = arith.constant 0 : index
    %c128 = arith.constant 128 : index
    %3 = vector.load %arg9[%c0_2, %c128] : memref<8x768xbf16, #tpu.memory_space<vmem>>, vector<4x256xbf16>
    tpu.vector_store %arg9[%c0_2, %c128], %2 {strides = array<i32>} : memref<8x768xbf16, #tpu.memory_space<vmem>>, vector<4x256xbf16>,
    %c0_3 = arith.constant 0 : index
    %c0_4 = arith.constant 0 : index
    %c0_5 = arith.constant 0 : index
    %4 = vector.load %arg2[%c0_3, %c0_4, %c0_5] : memref<2x1x256xf32, #tpu.memory_space<vmem>>, vector<1x1x256xf32>
    %5 = vector.shape_cast %4 : vector<1x1x256xf32> to vector<1x256xf32>
    %6 = arith.truncf %5 : vector<1x256xf32> to vector<1x256xbf16>
    %c4 = arith.constant 4 : index
    %c128_6 = arith.constant 128 : index
    %7 = vector.load %arg9[%c4, %c128_6] : memref<8x768xbf16, #tpu.memory_space<vmem>>, vector<1x256xbf16>
    tpu.vector_store %arg9[%c4, %c128_6], %6 {strides = array<i32>} : memref<8x768xbf16, #tpu.memory_space<vmem>>, vector<1x256xbf16>,
    %c1 = arith.constant 1 : index
    %c0_7 = arith.constant 0 : index
    %c0_8 = arith.constant 0 : index
    %8 = vector.load %arg1[%c1, %c0_7, %c0_8] : memref<2x4x256xf32, #tpu.memory_space<vmem>>, vector<1x4x256xf32>
    %9 = vector.shape_cast %8 : vector<1x4x256xf32> to vector<4x256xf32>
    %10 = arith.truncf %9 : vector<4x256xf32> to vector<4x256xbf16>
    %c0_9 = arith.constant 0 : index
    %c384 = arith.constant 384 : index
    %11 = vector.load %arg9[%c0_9, %c384] : memref<8x768xbf16, #tpu.memory_space<vmem>>, vector<4x256xbf16>
    tpu.vector_store %arg9[%c0_9, %c384], %10 {strides = array<i32>} : memref<8x768xbf16, #tpu.memory_space<vmem>>, vector<4x256xbf16>,
    %c1_10 = arith.constant 1 : index
    %c0_11 = arith.constant 0 : index
    %c0_12 = arith.constant 0 : index
    %12 = vector.load %arg2[%c1_10, %c0_11, %c0_12] : memref<2x1x256xf32, #tpu.memory_space<vmem>>, vector<1x1x256xf32>
    %13 = vector.shape_cast %12 : vector<1x1x256xf32> to vector<1x256xf32>
    %14 = arith.truncf %13 : vector<1x256xf32> to vector<1x256xbf16>
    %c4_13 = arith.constant 4 : index
    %c384_14 = arith.constant 384 : index
    %15 = vector.load %arg9[%c4_13, %c384_14] : memref<8x768xbf16, #tpu.memory_space<vmem>>, vector<1x256xbf16>
    tpu.vector_store %arg9[%c4_13, %c384_14], %14 {strides = array<i32>} : memref<8x768xbf16, #tpu.memory_space<vmem>>, vector<1x256xbf16>,
    %cst = arith.constant 0.000000e+00 : bf16
    %16 = vector.broadcast %cst : bf16 to vector<3x768xbf16>
    %c5 = arith.constant 5 : index
    %c0_15 = arith.constant 0 : index
    %17 = vector.load %arg9[%c5, %c0_15] : memref<8x768xbf16, #tpu.memory_space<vmem>>, vector<3x768xbf16>
    tpu.vector_store %arg9[%c5, %c0_15], %16 {strides = array<i32>} : memref<8x768xbf16, #tpu.memory_space<vmem>>, vector<3x768xbf16>,
    %c0_16 = arith.constant 0 : index
    %c0_17 = arith.constant 0 : index
    %18 = vector.load %arg3[%c0_16, %c0_17] : memref<9x512xf32, #tpu.memory_space<vmem>>, vector<1x512xf32>
    %cst_18 = arith.constant 5.000000e-01 : f32
    %19 = vector.broadcast %cst_18 : f32 to vector<1x512xf32>
    %20 = arith.cmpf ogt, %18, %19 : vector<1x512xf32>
    %c1_19 = arith.constant 1 : index
    %c0_20 = arith.constant 0 : index
    %21 = vector.load %arg3[%c1_19, %c0_20] : memref<9x512xf32, #tpu.memory_space<vmem>>, vector<1x512xf32>
    %cst_21 = arith.constant 5.000000e-01 : f32
    %22 = vector.broadcast %cst_21 : f32 to vector<1x512xf32>
    %23 = arith.cmpf ogt, %21, %22 : vector<1x512xf32>
    %c2 = arith.constant 2 : index
    %c0_22 = arith.constant 0 : index
    %24 = vector.load %arg3[%c2, %c0_22] : memref<9x512xf32, #tpu.memory_space<vmem>>, vector<1x512xf32>
    %cst_23 = arith.constant 5.000000e-01 : f32
    %25 = vector.broadcast %cst_23 : f32 to vector<1x512xf32>
    %26 = arith.cmpf ogt, %24, %25 : vector<1x512xf32>
    %c3 = arith.constant 3 : index
    %c0_24 = arith.constant 0 : index
    %27 = vector.load %arg3[%c3, %c0_24] : memref<9x512xf32, #tpu.memory_space<vmem>>, vector<1x512xf32>
    %cst_25 = arith.constant 5.000000e-01 : f32
    %28 = vector.broadcast %cst_25 : f32 to vector<1x512xf32>
    %29 = arith.cmpf ogt, %27, %28 : vector<1x512xf32>
    %c4_26 = arith.constant 4 : index
    %c0_27 = arith.constant 0 : index
    %30 = vector.load %arg3[%c4_26, %c0_27] : memref<9x512xf32, #tpu.memory_space<vmem>>, vector<1x512xf32>
    %cst_28 = arith.constant 5.000000e-01 : f32
    %31 = vector.broadcast %cst_28 : f32 to vector<1x512xf32>
    %32 = arith.cmpf ogt, %30, %31 : vector<1x512xf32>
    %c5_29 = arith.constant 5 : index
    %c0_30 = arith.constant 0 : index
    %33 = vector.load %arg3[%c5_29, %c0_30] : memref<9x512xf32, #tpu.memory_space<vmem>>, vector<1x512xf32>
    %cst_31 = arith.constant 5.000000e-01 : f32
    %34 = vector.broadcast %cst_31 : f32 to vector<1x512xf32>
    %35 = arith.cmpf ogt, %33, %34 : vector<1x512xf32>
    %c6 = arith.constant 6 : index
    %c0_32 = arith.constant 0 : index
    %36 = vector.load %arg3[%c6, %c0_32] : memref<9x512xf32, #tpu.memory_space<vmem>>, vector<1x512xf32>
    %cst_33 = arith.constant 5.000000e-01 : f32
    %37 = vector.broadcast %cst_33 : f32 to vector<1x512xf32>
    %38 = arith.cmpf ogt, %36, %37 : vector<1x512xf32>
    %c7 = arith.constant 7 : index
    %c0_34 = arith.constant 0 : index
    %39 = vector.load %arg3[%c7, %c0_34] : memref<9x512xf32, #tpu.memory_space<vmem>>, vector<1x512xf32>
    %cst_35 = arith.constant 5.000000e-01 : f32
    %40 = vector.broadcast %cst_35 : f32 to vector<1x512xf32>
    %41 = arith.cmpf ogt, %39, %40 : vector<1x512xf32>
    %c8 = arith.constant 8 : index
    %c0_36 = arith.constant 0 : index
    %42 = vector.load %arg3[%c8, %c0_36] : memref<9x512xf32, #tpu.memory_space<vmem>>, vector<1x512xf32>
    %cst_37 = arith.constant 5.000000e-01 : f32
    %43 = vector.broadcast %cst_37 : f32 to vector<1x512xf32>
    %44 = arith.cmpf ogt, %42, %43 : vector<1x512xf32>
    %c0_38 = arith.constant 0 : index
    %c111 = arith.constant 111 : index
    %45 = vector.load %arg9[%c0_38, %c111] : memref<8x768xbf16, #tpu.memory_space<vmem>>, vector<8x512xbf16>
    %cst_39 = arith.constant 0.000000e+00 : bf16
    %46 = vector.broadcast %cst_39 : bf16 to vector<8x512xbf16>
    %47 = vector.shape_cast %20 : vector<1x512xi1> to vector<1x512xi1>
    %48 = vector.broadcast %47 : vector<1x512xi1> to vector<8x512xi1>
    %49 = arith.select %48, %45, %46 : vector<8x512xi1>, vector<8x512xbf16>
    %c0_40 = arith.constant 0 : index
    %c0_41 = arith.constant 0 : index
    %50 = vector.load %arg10[%c0_40, %c0_41] : memref<72x512xbf16, #tpu.memory_space<vmem>>, vector<8x512xbf16>
    tpu.vector_store %arg10[%c0_40, %c0_41], %49 {strides = array<i32>} : memref<72x512xbf16, #tpu.memory_space<vmem>>, vector<8x512xbf16>,
    %c0_42 = arith.constant 0 : index
    %c112 = arith.constant 112 : index
    %51 = vector.load %arg9[%c0_42, %c112] : memref<8x768xbf16, #tpu.memory_space<vmem>>, vector<8x512xbf16>
    %cst_43 = arith.constant 0.000000e+00 : bf16
    %52 = vector.broadcast %cst_43 : bf16 to vector<8x512xbf16>
    %53 = vector.shape_cast %23 : vector<1x512xi1> to vector<1x512xi1>
    %54 = vector.broadcast %53 : vector<1x512xi1> to vector<8x512xi1>
    %55 = arith.select %54, %51, %52 : vector<8x512xi1>, vector<8x512xbf16>
    %c8_44 = arith.constant 8 : index
    %c0_45 = arith.constant 0 : index
    %56 = vector.load %arg10[%c8_44, %c0_45] : memref<72x512xbf16, #tpu.memory_space<vmem>>, vector<8x512xbf16>
    tpu.vector_store %arg10[%c8_44, %c0_45], %55 {strides = array<i32>} : memref<72x512xbf16, #tpu.memory_space<vmem>>, vector<8x512xbf16>,
    %c0_46 = arith.constant 0 : index
    %c113 = arith.constant 113 : index
    %57 = vector.load %arg9[%c0_46, %c113] : memref<8x768xbf16, #tpu.memory_space<vmem>>, vector<8x512xbf16>
    %cst_47 = arith.constant 0.000000e+00 : bf16
    %58 = vector.broadcast %cst_47 : bf16 to vector<8x512xbf16>
    %59 = vector.shape_cast %26 : vector<1x512xi1> to vector<1x512xi1>
    %60 = vector.broadcast %59 : vector<1x512xi1> to vector<8x512xi1>
    %61 = arith.select %60, %57, %58 : vector<8x512xi1>, vector<8x512xbf16>
    %c16 = arith.constant 16 : index
    %c0_48 = arith.constant 0 : index
    %62 = vector.load %arg10[%c16, %c0_48] : memref<72x512xbf16, #tpu.memory_space<vmem>>, vector<8x512xbf16>
    tpu.vector_store %arg10[%c16, %c0_48], %61 {strides = array<i32>} : memref<72x512xbf16, #tpu.memory_space<vmem>>, vector<8x512xbf16>,
    %c0_49 = arith.constant 0 : index
    %c127 = arith.constant 127 : index
    %63 = vector.load %arg9[%c0_49, %c127] : memref<8x768xbf16, #tpu.memory_space<vmem>>, vector<8x512xbf16>
    %cst_50 = arith.constant 0.000000e+00 : bf16
    %64 = vector.broadcast %cst_50 : bf16 to vector<8x512xbf16>
    %65 = vector.shape_cast %29 : vector<1x512xi1> to vector<1x512xi1>
    %66 = vector.broadcast %65 : vector<1x512xi1> to vector<8x512xi1>
    %67 = arith.select %66, %63, %64 : vector<8x512xi1>, vector<8x512xbf16>
    %c24 = arith.constant 24 : index
    %c0_51 = arith.constant 0 : index
    %68 = vector.load %arg10[%c24, %c0_51] : memref<72x512xbf16, #tpu.memory_space<vmem>>, vector<8x512xbf16>
    tpu.vector_store %arg10[%c24, %c0_51], %67 {strides = array<i32>} : memref<72x512xbf16, #tpu.memory_space<vmem>>, vector<8x512xbf16>,
    %c0_52 = arith.constant 0 : index
    %c128_53 = arith.constant 128 : index
    %69 = vector.load %arg9[%c0_52, %c128_53] : memref<8x768xbf16, #tpu.memory_space<vmem>>, vector<8x512xbf16>
    %cst_54 = arith.constant 0.000000e+00 : bf16
    %70 = vector.broadcast %cst_54 : bf16 to vector<8x512xbf16>
    %71 = vector.shape_cast %32 : vector<1x512xi1> to vector<1x512xi1>
    %72 = vector.broadcast %71 : vector<1x512xi1> to vector<8x512xi1>
    %73 = arith.select %72, %69, %70 : vector<8x512xi1>, vector<8x512xbf16>
    %c32 = arith.constant 32 : index
    %c0_55 = arith.constant 0 : index
    %74 = vector.load %arg10[%c32, %c0_55] : memref<72x512xbf16, #tpu.memory_space<vmem>>, vector<8x512xbf16>
    tpu.vector_store %arg10[%c32, %c0_55], %73 {strides = array<i32>} : memref<72x512xbf16, #tpu.memory_space<vmem>>, vector<8x512xbf16>,
    %c0_56 = arith.constant 0 : index
    %c129 = arith.constant 129 : index
    %75 = vector.load %arg9[%c0_56, %c129] : memref<8x768xbf16, #tpu.memory_space<vmem>>, vector<8x512xbf16>
    %cst_57 = arith.constant 0.000000e+00 : bf16
    %76 = vector.broadcast %cst_57 : bf16 to vector<8x512xbf16>
    %77 = vector.shape_cast %35 : vector<1x512xi1> to vector<1x512xi1>
    %78 = vector.broadcast %77 : vector<1x512xi1> to vector<8x512xi1>
    %79 = arith.select %78, %75, %76 : vector<8x512xi1>, vector<8x512xbf16>
    %c40 = arith.constant 40 : index
    %c0_58 = arith.constant 0 : index
    %80 = vector.load %arg10[%c40, %c0_58] : memref<72x512xbf16, #tpu.memory_space<vmem>>, vector<8x512xbf16>
    tpu.vector_store %arg10[%c40, %c0_58], %79 {strides = array<i32>} : memref<72x512xbf16, #tpu.memory_space<vmem>>, vector<8x512xbf16>,
    %c0_59 = arith.constant 0 : index
    %c143 = arith.constant 143 : index
    %81 = vector.load %arg9[%c0_59, %c143] : memref<8x768xbf16, #tpu.memory_space<vmem>>, vector<8x512xbf16>
    %cst_60 = arith.constant 0.000000e+00 : bf16
    %82 = vector.broadcast %cst_60 : bf16 to vector<8x512xbf16>
    %83 = vector.shape_cast %38 : vector<1x512xi1> to vector<1x512xi1>
    %84 = vector.broadcast %83 : vector<1x512xi1> to vector<8x512xi1>
    %85 = arith.select %84, %81, %82 : vector<8x512xi1>, vector<8x512xbf16>
    %c48 = arith.constant 48 : index
    %c0_61 = arith.constant 0 : index
    %86 = vector.load %arg10[%c48, %c0_61] : memref<72x512xbf16, #tpu.memory_space<vmem>>, vector<8x512xbf16>
    tpu.vector_store %arg10[%c48, %c0_61], %85 {strides = array<i32>} : memref<72x512xbf16, #tpu.memory_space<vmem>>, vector<8x512xbf16>,
    %c0_62 = arith.constant 0 : index
    %c144 = arith.constant 144 : index
    %87 = vector.load %arg9[%c0_62, %c144] : memref<8x768xbf16, #tpu.memory_space<vmem>>, vector<8x512xbf16>
    %cst_63 = arith.constant 0.000000e+00 : bf16
    %88 = vector.broadcast %cst_63 : bf16 to vector<8x512xbf16>
    %89 = vector.shape_cast %41 : vector<1x512xi1> to vector<1x512xi1>
    %90 = vector.broadcast %89 : vector<1x512xi1> to vector<8x512xi1>
    %91 = arith.select %90, %87, %88 : vector<8x512xi1>, vector<8x512xbf16>
    %c56 = arith.constant 56 : index
    %c0_64 = arith.constant 0 : index
    %92 = vector.load %arg10[%c56, %c0_64] : memref<72x512xbf16, #tpu.memory_space<vmem>>, vector<8x512xbf16>
    tpu.vector_store %arg10[%c56, %c0_64], %91 {strides = array<i32>} : memref<72x512xbf16, #tpu.memory_space<vmem>>, vector<8x512xbf16>,
    %c0_65 = arith.constant 0 : index
    %c145 = arith.constant 145 : index
    %93 = vector.load %arg9[%c0_65, %c145] : memref<8x768xbf16, #tpu.memory_space<vmem>>, vector<8x512xbf16>
    %cst_66 = arith.constant 0.000000e+00 : bf16
    %94 = vector.broadcast %cst_66 : bf16 to vector<8x512xbf16>
    %95 = vector.shape_cast %44 : vector<1x512xi1> to vector<1x512xi1>
    %96 = vector.broadcast %95 : vector<1x512xi1> to vector<8x512xi1>
    %97 = arith.select %96, %93, %94 : vector<8x512xi1>, vector<8x512xbf16>
    %c64 = arith.constant 64 : index
    %c0_67 = arith.constant 0 : index
    %98 = vector.load %arg10[%c64, %c0_67] : memref<72x512xbf16, #tpu.memory_space<vmem>>, vector<8x512xbf16>
    tpu.vector_store %arg10[%c64, %c0_67], %97 {strides = array<i32>} : memref<72x512xbf16, #tpu.memory_space<vmem>>, vector<8x512xbf16>,
    %c0_68 = arith.constant 0 : index
    %c0_69 = arith.constant 0 : index
    %99 = vector.load %arg4[%c0_68, %c0_69] : memref<8x72xbf16, #tpu.memory_space<vmem>>, vector<8x72xbf16>
    %c0_70 = arith.constant 0 : index
    %c0_71 = arith.constant 0 : index
    %100 = vector.load %arg10[%c0_70, %c0_71] : memref<72x512xbf16, #tpu.memory_space<vmem>>, vector<72x512xbf16>
    %cst_72 = arith.constant dense<0.000000e+00> : vector<8x512xf32>
    %101 = tpu.matmul %99, %100, %cst_72 {dimension_numbers = #tpu.dot_dimension_numbers<[1], [0], [0], [1], [0, 0, 1, 1], [], []>} : vector<8x72xbf16>, vector<72x512xbf16>, vector<8x512xf32> -> vector<8x512xf32>
    %c0_73 = arith.constant 0 : index
    %c0_74 = arith.constant 0 : index
    %102 = vector.load %arg5[%c0_73, %c0_74] : memref<8x1xf32, #tpu.memory_space<vmem>>, vector<8x1xf32>
    %103 = vector.broadcast %102 : vector<8x1xf32> to vector<8x512xf32>
    %104 = arith.addf %101, %103 : vector<8x512xf32>
    %cst_75 = arith.constant 2.000000e-01 : f32
    %105 = vector.broadcast %cst_75 : f32 to vector<8x512xf32>
    %106 = arith.mulf %105, %104 : vector<8x512xf32>
    %107 = arith.maximumf %104, %106 : vector<8x512xf32>
    %108 = arith.truncf %107 : vector<8x512xf32> to vector<8x512xbf16>
    %c0_76 = arith.constant 0 : index
    %c128_77 = arith.constant 128 : index
    %109 = vector.load %arg11[%c0_76, %c128_77] : memref<8x768xbf16, #tpu.memory_space<vmem>>, vector<8x512xbf16>
    tpu.vector_store %arg11[%c0_76, %c128_77], %108 {strides = array<i32>} : memref<8x768xbf16, #tpu.memory_space<vmem>>, vector<8x512xbf16>,
    %c0_78 = arith.constant 0 : index
    %c111_79 = arith.constant 111 : index
    %110 = vector.load %arg11[%c0_78, %c111_79] : memref<8x768xbf16, #tpu.memory_space<vmem>>, vector<8x512xbf16>
    %cst_80 = arith.constant 0.000000e+00 : bf16
    %111 = vector.broadcast %cst_80 : bf16 to vector<8x512xbf16>
    %112 = vector.shape_cast %20 : vector<1x512xi1> to vector<1x512xi1>
    %113 = vector.broadcast %112 : vector<1x512xi1> to vector<8x512xi1>
    %114 = arith.select %113, %110, %111 : vector<8x512xi1>, vector<8x512xbf16>
    %c0_81 = arith.constant 0 : index
    %c0_82 = arith.constant 0 : index
    %115 = vector.load %arg12[%c0_81, %c0_82] : memref<72x512xbf16, #tpu.memory_space<vmem>>, vector<8x512xbf16>
    tpu.vector_store %arg12[%c0_81, %c0_82], %114 {strides = array<i32>} : memref<72x512xbf16, #tpu.memory_space<vmem>>, vector<8x512xbf16>,
    %c0_83 = arith.constant 0 : index
    %c112_84 = arith.constant 112 : index
    %116 = vector.load %arg11[%c0_83, %c112_84] : memref<8x768xbf16, #tpu.memory_space<vmem>>, vector<8x512xbf16>
    %cst_85 = arith.constant 0.000000e+00 : bf16
    %117 = vector.broadcast %cst_85 : bf16 to vector<8x512xbf16>
    %118 = vector.shape_cast %23 : vector<1x512xi1> to vector<1x512xi1>
    %119 = vector.broadcast %118 : vector<1x512xi1> to vector<8x512xi1>
    %120 = arith.select %119, %116, %117 : vector<8x512xi1>, vector<8x512xbf16>
    %c8_86 = arith.constant 8 : index
    %c0_87 = arith.constant 0 : index
    %121 = vector.load %arg12[%c8_86, %c0_87] : memref<72x512xbf16, #tpu.memory_space<vmem>>, vector<8x512xbf16>
    tpu.vector_store %arg12[%c8_86, %c0_87], %120 {strides = array<i32>} : memref<72x512xbf16, #tpu.memory_space<vmem>>, vector<8x512xbf16>,
    %c0_88 = arith.constant 0 : index
    %c113_89 = arith.constant 113 : index
    %122 = vector.load %arg11[%c0_88, %c113_89] : memref<8x768xbf16, #tpu.memory_space<vmem>>, vector<8x512xbf16>
    %cst_90 = arith.constant 0.000000e+00 : bf16
    %123 = vector.broadcast %cst_90 : bf16 to vector<8x512xbf16>
    %124 = vector.shape_cast %26 : vector<1x512xi1> to vector<1x512xi1>
    %125 = vector.broadcast %124 : vector<1x512xi1> to vector<8x512xi1>
    %126 = arith.select %125, %122, %123 : vector<8x512xi1>, vector<8x512xbf16>
    %c16_91 = arith.constant 16 : index
    %c0_92 = arith.constant 0 : index
    %127 = vector.load %arg12[%c16_91, %c0_92] : memref<72x512xbf16, #tpu.memory_space<vmem>>, vector<8x512xbf16>
    tpu.vector_store %arg12[%c16_91, %c0_92], %126 {strides = array<i32>} : memref<72x512xbf16, #tpu.memory_space<vmem>>, vector<8x512xbf16>,
    %c0_93 = arith.constant 0 : index
    %c127_94 = arith.constant 127 : index
    %128 = vector.load %arg11[%c0_93, %c127_94] : memref<8x768xbf16, #tpu.memory_space<vmem>>, vector<8x512xbf16>
    %cst_95 = arith.constant 0.000000e+00 : bf16
    %129 = vector.broadcast %cst_95 : bf16 to vector<8x512xbf16>
    %130 = vector.shape_cast %29 : vector<1x512xi1> to vector<1x512xi1>
    %131 = vector.broadcast %130 : vector<1x512xi1> to vector<8x512xi1>
    %132 = arith.select %131, %128, %129 : vector<8x512xi1>, vector<8x512xbf16>
    %c24_96 = arith.constant 24 : index
    %c0_97 = arith.constant 0 : index
    %133 = vector.load %arg12[%c24_96, %c0_97] : memref<72x512xbf16, #tpu.memory_space<vmem>>, vector<8x512xbf16>
    tpu.vector_store %arg12[%c24_96, %c0_97], %132 {strides = array<i32>} : memref<72x512xbf16, #tpu.memory_space<vmem>>, vector<8x512xbf16>,
    %c0_98 = arith.constant 0 : index
    %c128_99 = arith.constant 128 : index
    %134 = vector.load %arg11[%c0_98, %c128_99] : memref<8x768xbf16, #tpu.memory_space<vmem>>, vector<8x512xbf16>
    %cst_100 = arith.constant 0.000000e+00 : bf16
    %135 = vector.broadcast %cst_100 : bf16 to vector<8x512xbf16>
    %136 = vector.shape_cast %32 : vector<1x512xi1> to vector<1x512xi1>
    %137 = vector.broadcast %136 : vector<1x512xi1> to vector<8x512xi1>
    %138 = arith.select %137, %134, %135 : vector<8x512xi1>, vector<8x512xbf16>
    %c32_101 = arith.constant 32 : index
    %c0_102 = arith.constant 0 : index
    %139 = vector.load %arg12[%c32_101, %c0_102] : memref<72x512xbf16, #tpu.memory_space<vmem>>, vector<8x512xbf16>
    tpu.vector_store %arg12[%c32_101, %c0_102], %138 {strides = array<i32>} : memref<72x512xbf16, #tpu.memory_space<vmem>>, vector<8x512xbf16>,
    %c0_103 = arith.constant 0 : index
    %c129_104 = arith.constant 129 : index
    %140 = vector.load %arg11[%c0_103, %c129_104] : memref<8x768xbf16, #tpu.memory_space<vmem>>, vector<8x512xbf16>
    %cst_105 = arith.constant 0.000000e+00 : bf16
    %141 = vector.broadcast %cst_105 : bf16 to vector<8x512xbf16>
    %142 = vector.shape_cast %35 : vector<1x512xi1> to vector<1x512xi1>
    %143 = vector.broadcast %142 : vector<1x512xi1> to vector<8x512xi1>
    %144 = arith.select %143, %140, %141 : vector<8x512xi1>, vector<8x512xbf16>
    %c40_106 = arith.constant 40 : index
    %c0_107 = arith.constant 0 : index
    %145 = vector.load %arg12[%c40_106, %c0_107] : memref<72x512xbf16, #tpu.memory_space<vmem>>, vector<8x512xbf16>
    tpu.vector_store %arg12[%c40_106, %c0_107], %144 {strides = array<i32>} : memref<72x512xbf16, #tpu.memory_space<vmem>>, vector<8x512xbf16>,
    %c0_108 = arith.constant 0 : index
    %c143_109 = arith.constant 143 : index
    %146 = vector.load %arg11[%c0_108, %c143_109] : memref<8x768xbf16, #tpu.memory_space<vmem>>, vector<8x512xbf16>
    %cst_110 = arith.constant 0.000000e+00 : bf16
    %147 = vector.broadcast %cst_110 : bf16 to vector<8x512xbf16>
    %148 = vector.shape_cast %38 : vector<1x512xi1> to vector<1x512xi1>
    %149 = vector.broadcast %148 : vector<1x512xi1> to vector<8x512xi1>
    %150 = arith.select %149, %146, %147 : vector<8x512xi1>, vector<8x512xbf16>
    %c48_111 = arith.constant 48 : index
    %c0_112 = arith.constant 0 : index
    %151 = vector.load %arg12[%c48_111, %c0_112] : memref<72x512xbf16, #tpu.memory_space<vmem>>, vector<8x512xbf16>
    tpu.vector_store %arg12[%c48_111, %c0_112], %150 {strides = array<i32>} : memref<72x512xbf16, #tpu.memory_space<vmem>>, vector<8x512xbf16>,
    %c0_113 = arith.constant 0 : index
    %c144_114 = arith.constant 144 : index
    %152 = vector.load %arg11[%c0_113, %c144_114] : memref<8x768xbf16, #tpu.memory_space<vmem>>, vector<8x512xbf16>
    %cst_115 = arith.constant 0.000000e+00 : bf16
    %153 = vector.broadcast %cst_115 : bf16 to vector<8x512xbf16>
    %154 = vector.shape_cast %41 : vector<1x512xi1> to vector<1x512xi1>
    %155 = vector.broadcast %154 : vector<1x512xi1> to vector<8x512xi1>
    %156 = arith.select %155, %152, %153 : vector<8x512xi1>, vector<8x512xbf16>
    %c56_116 = arith.constant 56 : index
    %c0_117 = arith.constant 0 : index
    %157 = vector.load %arg12[%c56_116, %c0_117] : memref<72x512xbf16, #tpu.memory_space<vmem>>, vector<8x512xbf16>
    tpu.vector_store %arg12[%c56_116, %c0_117], %156 {strides = array<i32>} : memref<72x512xbf16, #tpu.memory_space<vmem>>, vector<8x512xbf16>,
    %c0_118 = arith.constant 0 : index
    %c145_119 = arith.constant 145 : index
    %158 = vector.load %arg11[%c0_118, %c145_119] : memref<8x768xbf16, #tpu.memory_space<vmem>>, vector<8x512xbf16>
    %cst_120 = arith.constant 0.000000e+00 : bf16
    %159 = vector.broadcast %cst_120 : bf16 to vector<8x512xbf16>
    %160 = vector.shape_cast %44 : vector<1x512xi1> to vector<1x512xi1>
    %161 = vector.broadcast %160 : vector<1x512xi1> to vector<8x512xi1>
    %162 = arith.select %161, %158, %159 : vector<8x512xi1>, vector<8x512xbf16>
    %c64_121 = arith.constant 64 : index
    %c0_122 = arith.constant 0 : index
    %163 = vector.load %arg12[%c64_121, %c0_122] : memref<72x512xbf16, #tpu.memory_space<vmem>>, vector<8x512xbf16>
    tpu.vector_store %arg12[%c64_121, %c0_122], %162 {strides = array<i32>} : memref<72x512xbf16, #tpu.memory_space<vmem>>, vector<8x512xbf16>,
    %c0_123 = arith.constant 0 : index
    %c0_124 = arith.constant 0 : index
    %164 = vector.load %arg6[%c0_123, %c0_124] : memref<8x72xbf16, #tpu.memory_space<vmem>>, vector<8x72xbf16>
    %c0_125 = arith.constant 0 : index
    %c0_126 = arith.constant 0 : index
    %165 = vector.load %arg12[%c0_125, %c0_126] : memref<72x512xbf16, #tpu.memory_space<vmem>>, vector<72x512xbf16>
    %cst_127 = arith.constant dense<0.000000e+00> : vector<8x512xf32>
    %166 = tpu.matmul %164, %165, %cst_127 {dimension_numbers = #tpu.dot_dimension_numbers<[1], [0], [0], [1], [0, 0, 1, 1], [], []>} : vector<8x72xbf16>, vector<72x512xbf16>, vector<8x512xf32> -> vector<8x512xf32>
    %c0_128 = arith.constant 0 : index
    %c0_129 = arith.constant 0 : index
    %167 = vector.load %arg7[%c0_128, %c0_129] : memref<8x1xf32, #tpu.memory_space<vmem>>, vector<8x1xf32>
    %168 = vector.broadcast %167 : vector<8x1xf32> to vector<8x512xf32>
    %169 = arith.addf %166, %168 : vector<8x512xf32>
    %170 = math.tanh %169 : vector<8x512xf32>
    %171 = vector.extract_strided_slice %170 {offsets = [0, 0], sizes = [8, 256], strides = [1, 1]} : vector<8x512xf32> to vector<8x256xf32>
    %c0_130 = arith.constant 0 : index
    %c0_131 = arith.constant 0 : index
    %c0_132 = arith.constant 0 : index
    %172 = vector.load %arg8[%c0_130, %c0_131, %c0_132] : memref<2x8x256xf32, #tpu.memory_space<vmem>>, vector<1x8x256xf32>
    %173 = vector.shape_cast %172 : vector<1x8x256xf32> to vector<8x256xf32>
    %174 = vector.shape_cast %171 : vector<8x256xf32> to vector<1x8x256xf32>
    tpu.vector_store %arg8[%c0_130, %c0_131, %c0_132], %174 {strides = array<i32>} : memref<2x8x256xf32, #tpu.memory_space<vmem>>, vector<1x8x256xf32>,
    %175 = vector.extract_strided_slice %170 {offsets = [0, 256], sizes = [8, 256], strides = [1, 1]} : vector<8x512xf32> to vector<8x256xf32>
    %c1_133 = arith.constant 1 : index
    %c0_134 = arith.constant 0 : index
    %c0_135 = arith.constant 0 : index
    %176 = vector.load %arg8[%c1_133, %c0_134, %c0_135] : memref<2x8x256xf32, #tpu.memory_space<vmem>>, vector<1x8x256xf32>
    %177 = vector.shape_cast %176 : vector<1x8x256xf32> to vector<8x256xf32>
    %178 = vector.shape_cast %175 : vector<8x256xf32> to vector<1x8x256xf32>
    tpu.vector_store %arg8[%c1_133, %c0_134, %c0_135], %178 {strides = array<i32>} : memref<2x8x256xf32, #tpu.memory_space<vmem>>, vector<1x8x256xf32>,
    return
  }
  func.func @transform_0(%arg0: i32) -> (i32, i32, i32) {
    %c0_i32 = arith.constant 0 : i32
    %c0_i32_0 = arith.constant 0 : i32
    %c0_i32_1 = arith.constant 0 : i32
    return %arg0, %c0_i32, %c0_i32_0 : i32, i32, i32
  }
  func.func @transform_1(%arg0: i32) -> (i32, i32, i32) {
    %c0_i32 = arith.constant 0 : i32
    %c0_i32_0 = arith.constant 0 : i32
    %c0_i32_1 = arith.constant 0 : i32
    return %arg0, %c0_i32, %c0_i32_0 : i32, i32, i32
  }
  func.func @transform_2(%arg0: i32) -> (i32, i32) {
    %c0_i32 = arith.constant 0 : i32
    %c0_i32_0 = arith.constant 0 : i32
    %c0_i32_1 = arith.constant 0 : i32
    return %c0_i32, %c0_i32_0 : i32, i32
  }
  func.func @transform_3(%arg0: i32) -> (i32, i32) {
    %c0_i32 = arith.constant 0 : i32
    %c0_i32_0 = arith.constant 0 : i32
    %c0_i32_1 = arith.constant 0 : i32
    return %c0_i32, %c0_i32_0 : i32, i32
  }
  func.func @transform_4(%arg0: i32) -> (i32, i32) {
    %c0_i32 = arith.constant 0 : i32
    %c0_i32_0 = arith.constant 0 : i32
    %c0_i32_1 = arith.constant 0 : i32
    return %c0_i32, %c0_i32_0 : i32, i32
  }
  func.func @transform_5(%arg0: i32) -> (i32, i32) {
    %c0_i32 = arith.constant 0 : i32
    %c0_i32_0 = arith.constant 0 : i32
    %c0_i32_1 = arith.constant 0 : i32
    return %c0_i32, %c0_i32_0 : i32, i32
  }
  func.func @transform_6(%arg0: i32) -> (i32, i32) {
    %c0_i32 = arith.constant 0 : i32
    %c0_i32_0 = arith.constant 0 : i32
    %c0_i32_1 = arith.constant 0 : i32
    return %c0_i32, %c0_i32_0 : i32, i32
  }
  func.func @transform_7(%arg0: i32) -> (i32, i32, i32) {
    %c0_i32 = arith.constant 0 : i32
    %c0_i32_0 = arith.constant 0 : i32
    %c0_i32_1 = arith.constant 0 : i32
    return %arg0, %c0_i32, %c0_i32_0 : i32, i32, i32
  }
}

</mosaic_0001>

<llo_original>
// kernel: tpu_custom_call.1
$region0: #{tpu_custom_call.1}
  #allocation0 [shape = 'u32[]', space=smem, size = 0x4, offset = 0x4, fixed_abs, tag = 'smem constant byte address 0x4 - core index']
  #allocation1 [shape = 'u32[144,128]{1,0:T(1,128)}', space=vmem, size = 0x12000, scoped, tag = 'internal scratch']
  #allocation2 [shape = 'bf16[8,768]{1,0:T(8,128)(2,1)}', space=vmem, size = 0x3000, scoped, tag = 'scratch operand']
  #allocation3 [shape = 'bf16[72,512]{1,0:T(8,128)(2,1)}', space=vmem, size = 0x12000, scoped, tag = 'scratch operand']
  #allocation4 [shape = 'bf16[8,768]{1,0:T(8,128)(2,1)}', space=vmem, size = 0x3000, scoped, tag = 'scratch operand']
  #allocation5 [shape = 'bf16[72,512]{1,0:T(8,128)(2,1)}', space=vmem, size = 0x12000, scoped, tag = 'scratch operand']
  %s0 = inlined_call_operand.vmem [shape: f32[2,4,256], index: 0, kind: input, shape index: {}]
  %s1 = inlined_call_operand.vmem [shape: f32[2,1,256], index: 1, kind: input, shape index: {}]
  %s2 = inlined_call_operand.hbm [shape: f32[9,512], index: 2, kind: input, shape index: {}]
  %s3 = inlined_call_operand.vmem [shape: bf16[8,72], index: 3, kind: input, shape index: {}]
  %s4 = inlined_call_operand.vmem [shape: f32[8,1], index: 4, kind: input, shape index: {}]
  %s5 = inlined_call_operand.vmem [shape: bf16[8,72], index: 5, kind: input, shape index: {}]
  %s6 = inlined_call_operand.vmem [shape: f32[8,1], index: 6, kind: input, shape index: {}]
  %s7 = inlined_call_operand.hbm [shape: f32[2,8,256], index: 7, kind: output, shape index: {}]
  %s8 = sld [smem:[#allocation0]]
  $region42: #{tpu_custom_call.1} parent=0
    _
  %s10 = ssub.s32 1, %s8
  %s11 = scalar_select 0, %s10, %s8
  $region1: #{tpu_custom_call.1} parent=0
    #allocation6 [shape = 'u8[32768]{0}', space=vmem, size = 0x8000, scoped, tag = 'input window, operand 2, single buffered']
    #allocation7 [shape = 's32[1]{0}', space=sflag, size = 0x4, scoped, tag = 'scoped memory for tpu_custom_call.1']
    #allocation8 [shape = 's32[1]{0}', space=sflag, size = 0x4, scoped, tag = 'scoped memory for tpu_custom_call.1']
    #allocation9 [shape = 'u8[16384]{0}', space=vmem, size = 0x4000, scoped, tag = 'output window, operand 0, single buffered']
    %12 = vsyncpa [#allocation7], 0
    %13 = vsyncpa [#allocation8], 0
    // Predicated region
    $region2: #{tpu_custom_call.1} parent=1 // pred_check
      _
    $region3: #{tpu_custom_call.1} parent=1 // pred_check_branch
      %15 = sbr.rel (0) target = $region5
    $region4: #{tpu_custom_call.1} parent=1 // pred_region
      _
    $region5: #{tpu_custom_call.1} parent=1 // pred_fallthru
      _
    // Predicated region
    $region6: #{tpu_custom_call.1} parent=1 // pred_check
      _
    $region7: #{tpu_custom_call.1} parent=1 // pred_check_branch
      %17 = sbr.rel (0) target = $region9
    $region8: #{tpu_custom_call.1} parent=1 // pred_region
      _
    $region9: #{tpu_custom_call.1} parent=1 // pred_fallthru
      _
    // Predicated region
    $region10: #{tpu_custom_call.1} parent=1 // pred_check
      _
    $region11: #{tpu_custom_call.1} parent=1 // pred_check_branch
      %19 = sbr.rel (0) target = $region13
    $region12: #{tpu_custom_call.1} parent=1 // pred_region
      %s21 = ssub.s32 1024, 1024
      %22 = vsyncadd [#allocation7], %s21
      %s23 = sshll.u32 [#allocation6], 4
      %s24 = int_to_ptr.vmem [resolvable:$true] %s23
      %29 = dma.hbm_to_vmem [thread:$0]  %s2, 1024, %s24, [#allocation7], 512, 512, 32
    $region13: #{tpu_custom_call.1} parent=1 // pred_fallthru
      _
    // Predicated region
    $region14: #{tpu_custom_call.1} parent=1 // pred_check
      _
    $region15: #{tpu_custom_call.1} parent=1 // pred_check_branch
      %31 = sbr.rel (0) target = $region17
    $region16: #{tpu_custom_call.1} parent=1 // pred_region
      _
    $region17: #{tpu_custom_call.1} parent=1 // pred_fallthru
      _
    // Predicated region
    $region18: #{tpu_custom_call.1} parent=1 // pred_check
      _
    $region19: #{tpu_custom_call.1} parent=1 // pred_check_branch
      %33 = sbr.rel (0) target = $region21
    $region20: #{tpu_custom_call.1} parent=1 // pred_region
      _
    $region21: #{tpu_custom_call.1} parent=1 // pred_fallthru
      _
    // Predicated region
    $region22: #{tpu_custom_call.1} parent=1 // pred_check
      _
    $region23: #{tpu_custom_call.1} parent=1 // pred_check_branch
      %35 = sbr.rel (0) target = $region25
    $region24: #{tpu_custom_call.1} parent=1 // pred_region
      _
    $region25: #{tpu_custom_call.1} parent=1 // pred_fallthru
      _
    // Predicated region
    $region26: #{tpu_custom_call.1} parent=1 // pred_check
      _
    $region27: #{tpu_custom_call.1} parent=1 // pred_check_branch
      %37 = sbr.rel (0) target = $region29
    $region28: #{tpu_custom_call.1} parent=1 // pred_region
      _
    $region29: #{tpu_custom_call.1} parent=1 // pred_fallthru
      _
    // Predicated region
    $region30: #{tpu_custom_call.1} parent=1 // pred_check
      _
    $region31: #{tpu_custom_call.1} parent=1 // pred_check_branch
      %39 = sbr.rel (0) target = $region33
    $region32: #{tpu_custom_call.1} parent=1 // pred_region
      %40 = dma.done [#allocation7], 1024
    $region33: #{tpu_custom_call.1} parent=1 // pred_fallthru
      _
    %v44 = vld [vmem:[%s0] sm:$0xff]
    %v46 = vcombine.high %v44, %v44
    %v48 = vpack.c.bf16 %v44, %v44
    %v49 = vpack.c.bf16 %v46, %v46
    %v52 = vunpack.c.l.b16 %v48
    %v53 = vunpack.c.l.b16 %v49
    %v54 = vpack.c.b16 %v53, %v52
    %56 = vst [vmem:[#allocation2 + $0x4] sm:$0x33] %v54
    %v57 = vld [vmem:[%s1] sm:$0x3]
    %v59 = vlaneseq
    %v60 = vshrl.u32 %v59, 7
    %v61 = vsub.s32 0, %v60
    %v62 = vrot.slane %v57, %v61
    %v63 = vlaneseq
    %v64 = vshrl.u32 %v63, 7
    %v65 = vsub.s32 1, %v64
    %v66 = vrot.slane %v57, %v65
    %v69 = vpack.c.bf16 %v62, %v62
    %v70 = vpack.c.bf16 %v66, %v66
    %v73 = vunpack.c.l.b16 %v69
    %v74 = vunpack.c.l.b16 %v70
    %v75 = vpack.c.b16 %v74, %v73
    %v76 = vrot.slane %v75, 6
    %vm78 = vcmask 1042434
    %vm79 = vsmask.f32 2304
    %vm80 = vmand %vm78, %vm79
    %vm81 = vcmask 1046534
    %vm82 = vsmask.f32 6400
    %vm83 = vmand %vm81, %vm82
    %vm84 = vmor %vm83, %vm80
    %v85 = vld [vmem:[#allocation2 + $0x4] sm:$0x44]
    %v86 = vsel %vm84, %v76, %v85
    %87 = vst [vmem:[#allocation2 + $0x4] sm:$0x44] %v86
    %s88 = scalar_lea.vmem %s0, 8
    %v89 = vld [vmem:[%s88] sm:$0xff]
    %v91 = vcombine.high %v89, %v89
    %v93 = vpack.c.bf16 %v89, %v89
    %v94 = vpack.c.bf16 %v91, %v91
    %v97 = vunpack.c.l.b16 %v93
    %v98 = vunpack.c.l.b16 %v94
    %v99 = vpack.c.b16 %v98, %v97
    %101 = vst [vmem:[#allocation2 + $0xc] sm:$0x33] %v99
    %s102 = scalar_lea.vmem %s1, 2
    %v103 = vld [vmem:[%s102] sm:$0x3]
    %v105 = vlaneseq
    %v106 = vshrl.u32 %v105, 7
    %v107 = vsub.s32 0, %v106
    %v108 = vrot.slane %v103, %v107
    %v109 = vlaneseq
    %v110 = vshrl.u32 %v109, 7
    %v111 = vsub.s32 1, %v110
    %v112 = vrot.slane %v103, %v111
    %v115 = vpack.c.bf16 %v108, %v108
    %v116 = vpack.c.bf16 %v112, %v112
    %v119 = vunpack.c.l.b16 %v115
    %v120 = vunpack.c.l.b16 %v116
    %v121 = vpack.c.b16 %v120, %v119
    %v122 = vrot.slane %v121, 6
    %v124 = vld [vmem:[#allocation2 + $0xc] sm:$0x44]
    %v125 = vsel %vm84, %v122, %v124
    %126 = vst [vmem:[#allocation2 + $0xc] sm:$0x44] %v125
    %vm127 = vcmask 1043458
    %vm128 = vsmask.f32 7946
    %vm129 = vmand %vm127, %vm128
    %vm130 = vcmask 1047558
    %vm131 = vsmask.f32 7962
    %vm132 = vmand %vm130, %vm131
    %vm133 = vmor %vm132, %vm129
    %v134 = vld [vmem:[#allocation2] sm:$0xcc]
    %v135 = vsel %vm133, 0, %v134
    %136 = vst [vmem:[#allocation2] sm:$0xcc] %v135
    %v137 = vld [vmem:[#allocation2 + $0x8] sm:$0xcc]
    %v138 = vsel %vm133, 0, %v137
    %139 = vst [vmem:[#allocation2 + $0x8] sm:$0xcc] %v138
    %v140 = vld [vmem:[#allocation2 + $0x10] sm:$0xcc]
    %v141 = vsel %vm133, 0, %v140
    %142 = vst [vmem:[#allocation2 + $0x10] sm:$0xcc] %v141
    %v143 = vld [vmem:[#allocation6] ss:$8 sm:$0xf]
    %vm144 = vcmp.gt.f32.partialorder %v143, 0.5
    %s145 = scalar_lea.vmem [#allocation6], 1
    %v146 = vld [vmem:[%s145] ss:$8 sm:$0xf]
    %vm147 = vcmp.gt.f32.partialorder %v146, 0.5
    %s148 = scalar_lea.vmem [#allocation6], 2
    %v149 = vld [vmem:[%s148] ss:$8 sm:$0xf]
    %vm150 = vcmp.gt.f32.partialorder %v149, 0.5
    %s151 = scalar_lea.vmem [#allocation6], 3
    %v152 = vld [vmem:[%s151] ss:$8 sm:$0xf]
    %vm153 = vcmp.gt.f32.partialorder %v152, 0.5
    %s154 = scalar_lea.vmem [#allocation6], 4
    %v155 = vld [vmem:[%s154] ss:$8 sm:$0xf]
    %vm156 = vcmp.gt.f32.partialorder %v155, 0.5
    %s157 = scalar_lea.vmem [#allocation6], 5
    %v158 = vld [vmem:[%s157] ss:$8 sm:$0xf]
    %vm159 = vcmp.gt.f32.partialorder %v158, 0.5
    %s160 = scalar_lea.vmem [#allocation6], 6
    %v161 = vld [vmem:[%s160] ss:$8 sm:$0xf]
    %vm162 = vcmp.gt.f32.partialorder %v161, 0.5
    %s163 = scalar_lea.vmem [#allocation6], 7
    %v164 = vld [vmem:[%s163] ss:$8 sm:$0xf]
    %vm165 = vcmp.gt.f32.partialorder %v164, 0.5
    %s166 = scalar_lea.vmem [#allocation6], 32
    %v167 = vld [vmem:[%s166] ss:$8 sm:$0xf]
    %vm168 = vcmp.gt.f32.partialorder %v167, 0.5
    %v169 = vld [vmem:[#allocation2] sm:$0xff]
    %v170 = vld [vmem:[#allocation2 + $0x8] sm:$0xff]
    %v171 = vld [vmem:[#allocation2 + $0x10] sm:$0xf]
    %v172 = vsel %vm144, 1, 0
    %v173 = vlaneseq
    %v174 = vshrl.u32 %v173, 7
    %v175 = vsub.s32 0, %v174
    %v176 = vrot.slane %v172, %v175
    %v177 = vlaneseq
    %v178 = vshrl.u32 %v177, 7
    %v179 = vsub.s32 1, %v178
    %v180 = vrot.slane %v172, %v179
    %v181 = vlaneseq
    %v182 = vshrl.u32 %v181, 7
    %v183 = vsub.s32 2, %v182
    %v184 = vrot.slane %v172, %v183
    %v185 = vlaneseq
    %v186 = vshrl.u32 %v185, 7
    %v187 = vsub.s32 3, %v186
    %v188 = vrot.slane %v172, %v187
    %vm189 = vcmp.eq.s32.totalorder %v176, 1
    %vm190 = vcmp.eq.s32.totalorder %v180, 1
    %vm191 = vcmp.eq.s32.totalorder %v184, 1
    %vm192 = vcmp.eq.s32.totalorder %v188, 1
    %vm193 = vmpackc.low %vm190, %vm189
    %vm194 = vmpackc.low %vm192, %vm191
    %v195 = vsel %vm193, 65537, 0
    %v196 = vsel %vm194, 65537, 0
    %197 = vrot.lane.b32.xlu0 %v195, 111
    %v198 = vpop.permute.xlu0 %197
    %199 = vrot.lane.b32.xlu0 %v196, 111
    %v200 = vpop.permute.xlu0 %199
    %v201 = vrot.slane %v198, 4
    %v202 = vrot.slane %v200, 4
    %vm203 = vcmask 908288
    %v204 = vsel %vm203, %v201, %v198
    %vm205 = vcmask 1043456
    %v206 = vsel %vm205, %v201, %v202
    %v207 = vsel %vm203, %v206, %v200
    %vm208 = vcmp.ne.s16.totalorder %v204, 0
    %vm209 = vcmp.ne.s16.totalorder %v207, 0
    %vm210 = vcmp.ne.s16.totalorder %v202, 0
    %v211 = vsel %vm208, %v169, 0
    %v212 = vsel %vm209, %v170, 0
    %v213 = vsel %vm210, %v171, 0
    %217 = vrot.lane.b32.xlu0 %v211, 17
    %v218 = vpop.permute.xlu0 %217
    %219 = vrot.lane.b32.xlu0 %v212, 17
    %v220 = vpop.permute.xlu0 %219
    %221 = vrot.lane.b32.xlu0 %v213, 17
    %v222 = vpop.permute.xlu0 %221
    %v223 = vrot.slane %v218, 4
    %v224 = vrot.slane %v220, 4
    %v225 = vrot.slane %v222, 4
    %v226 = vsel %vm205, %v223, %v224
    %vm227 = vcmask 138240
    %v228 = vsel %vm227, %v218, %v226
    %v229 = vsel %vm205, %v224, %v225
    %v230 = vsel %vm227, %v220, %v229
    %233 = vst [vmem:[#allocation3] sm:$0xff] %v228
    %234 = vst [vmem:[#allocation3 + $0x8] sm:$0xff] %v230
    %v235 = vld [vmem:[#allocation2] sm:$0xff]
    %v236 = vld [vmem:[#allocation2 + $0x8] sm:$0xff]
    %v237 = vld [vmem:[#allocation2 + $0x10] sm:$0xf]
    %v238 = vsel %vm147, 1, 0
    %v239 = vlaneseq
    %v240 = vshrl.u32 %v239, 7
    %v241 = vsub.s32 0, %v240
    %v242 = vrot.slane %v238, %v241
    %v243 = vlaneseq
    %v244 = vshrl.u32 %v243, 7
    %v245 = vsub.s32 1, %v244
    %v246 = vrot.slane %v238, %v245
    %v247 = vlaneseq
    %v248 = vshrl.u32 %v247, 7
    %v249 = vsub.s32 2, %v248
    %v250 = vrot.slane %v238, %v249
    %v251 = vlaneseq
    %v252 = vshrl.u32 %v251, 7
    %v253 = vsub.s32 3, %v252
    %v254 = vrot.slane %v238, %v253
    %vm255 = vcmp.eq.s32.totalorder %v242, 1
    %vm256 = vcmp.eq.s32.totalorder %v246, 1
    %vm257 = vcmp.eq.s32.totalorder %v250, 1
    %vm258 = vcmp.eq.s32.totalorder %v254, 1
    %vm259 = vmpackc.low %vm256, %vm255
    %vm260 = vmpackc.low %vm258, %vm257
    %v261 = vsel %vm259, 65537, 0
    %v262 = vsel %vm260, 65537, 0
    %263 = vrot.lane.b32.xlu0 %v261, 112
    %v264 = vpop.permute.xlu0 %263
    %265 = vrot.lane.b32.xlu0 %v262, 112
    %v266 = vpop.permute.xlu0 %265
    %v267 = vrot.slane %v264, 4
    %v268 = vrot.slane %v266, 4
    %vm269 = vcmask 916480
    %v270 = vsel %vm269, %v267, %v264
    %v271 = vsel %vm205, %v267, %v268
    %v272 = vsel %vm269, %v271, %v266
    %vm273 = vcmp.ne.s16.totalorder %v270, 0
    %vm274 = vcmp.ne.s16.totalorder %v272, 0
    %vm275 = vcmp.ne.s16.totalorder %v268, 0
    %v276 = vsel %vm273, %v235, 0
    %v277 = vsel %vm274, %v236, 0
    %v278 = vsel %vm275, %v237, 0
    %282 = vrot.lane.b32.xlu0 %v276, 16
    %v283 = vpop.permute.xlu0 %282
    %284 = vrot.lane.b32.xlu0 %v277, 16
    %v285 = vpop.permute.xlu0 %284
    %286 = vrot.lane.b32.xlu0 %v278, 16
    %v287 = vpop.permute.xlu0 %286
    %v288 = vrot.slane %v283, 4
    %v289 = vrot.slane %v285, 4
    %v290 = vrot.slane %v287, 4
    %v291 = vsel %vm205, %v288, %v289
    %vm292 = vcmask 130048
    %v293 = vsel %vm292, %v283, %v291
    %v294 = vsel %vm205, %v289, %v290
    %v295 = vsel %vm292, %v285, %v294
    %298 = vst [vmem:[#allocation3 + $0x10] sm:$0xff] %v293
    %299 = vst [vmem:[#allocation3 + $0x18] sm:$0xff] %v295
    %v300 = vld [vmem:[#allocation2] sm:$0xff]
    %v301 = vld [vmem:[#allocation2 + $0x8] sm:$0xff]
    %v302 = vld [vmem:[#allocation2 + $0x10] sm:$0xf]
    %v303 = vsel %vm150, 1, 0
    %v304 = vlaneseq
    %v305 = vshrl.u32 %v304, 7
    %v306 = vsub.s32 0, %v305
    %v307 = vrot.slane %v303, %v306
    %v308 = vlaneseq
    %v309 = vshrl.u32 %v308, 7
    %v310 = vsub.s32 1, %v309
    %v311 = vrot.slane %v303, %v310
    %v312 = vlaneseq
    %v313 = vshrl.u32 %v312, 7
    %v314 = vsub.s32 2, %v313
    %v315 = vrot.slane %v303, %v314
    %v316 = vlaneseq
    %v317 = vshrl.u32 %v316, 7
    %v318 = vsub.s32 3, %v317
    %v319 = vrot.slane %v303, %v318
    %vm320 = vcmp.eq.s32.totalorder %v307, 1
    %vm321 = vcmp.eq.s32.totalorder %v311, 1
    %vm322 = vcmp.eq.s32.totalorder %v315, 1
    %vm323 = vcmp.eq.s32.totalorder %v319, 1
    %vm324 = vmpackc.low %vm321, %vm320
    %vm325 = vmpackc.low %vm323, %vm322
    %v326 = vsel %vm324, 65537, 0
    %v327 = vsel %vm325, 65537, 0
    %328 = vrot.lane.b32.xlu0 %v326, 113
    %v329 = vpop.permute.xlu0 %328
    %330 = vrot.lane.b32.xlu0 %v327, 113
    %v331 = vpop.permute.xlu0 %330
    %v332 = vrot.slane %v329, 4
    %v333 = vrot.slane %v331, 4
    %vm334 = vcmask 924672
    %v335 = vsel %vm334, %v332, %v329
    %v336 = vsel %vm205, %v332, %v333
    %v337 = vsel %vm334, %v336, %v331
    %vm338 = vcmp.ne.s16.totalorder %v335, 0
    %vm339 = vcmp.ne.s16.totalorder %v337, 0
    %vm340 = vcmp.ne.s16.totalorder %v333, 0
    %v341 = vsel %vm338, %v300, 0
    %v342 = vsel %vm339, %v301, 0
    %v343 = vsel %vm340, %v302, 0
    %347 = vrot.lane.b32.xlu0 %v341, 15
    %v348 = vpop.permute.xlu0 %347
    %349 = vrot.lane.b32.xlu0 %v342, 15
    %v350 = vpop.permute.xlu0 %349
    %351 = vrot.lane.b32.xlu0 %v343, 15
    %v352 = vpop.permute.xlu0 %351
    %v353 = vrot.slane %v348, 4
    %v354 = vrot.slane %v350, 4
    %v355 = vrot.slane %v352, 4
    %v356 = vsel %vm205, %v353, %v354
    %vm357 = vcmask 121856
    %v358 = vsel %vm357, %v348, %v356
    %v359 = vsel %vm205, %v354, %v355
    %v360 = vsel %vm357, %v350, %v359
    %363 = vst [vmem:[#allocation3 + $0x20] sm:$0xff] %v358
    %364 = vst [vmem:[#allocation3 + $0x28] sm:$0xff] %v360
    %v365 = vld [vmem:[#allocation2] sm:$0xff]
    %v366 = vld [vmem:[#allocation2 + $0x8] sm:$0xff]
    %v367 = vld [vmem:[#allocation2 + $0x10] sm:$0xf]
    %v368 = vsel %vm153, 1, 0
    %v369 = vlaneseq
    %v370 = vshrl.u32 %v369, 7
    %v371 = vsub.s32 0, %v370
    %v372 = vrot.slane %v368, %v371
    %v373 = vlaneseq
    %v374 = vshrl.u32 %v373, 7
    %v375 = vsub.s32 1, %v374
    %v376 = vrot.slane %v368, %v375
    %v377 = vlaneseq
    %v378 = vshrl.u32 %v377, 7
    %v379 = vsub.s32 2, %v378
    %v380 = vrot.slane %v368, %v379
    %v381 = vlaneseq
    %v382 = vshrl.u32 %v381, 7
    %v383 = vsub.s32 3, %v382
    %v384 = vrot.slane %v368, %v383
    %vm385 = vcmp.eq.s32.totalorder %v372, 1
    %vm386 = vcmp.eq.s32.totalorder %v376, 1
    %vm387 = vcmp.eq.s32.totalorder %v380, 1
    %vm388 = vcmp.eq.s32.totalorder %v384, 1
    %vm389 = vmpackc.low %vm386, %vm385
    %vm390 = vmpackc.low %vm388, %vm387
    %v391 = vsel %vm389, 65537, 0
    %v392 = vsel %vm390, 65537, 0
    %393 = vrot.lane.b32.xlu0 %v391, 127
    %v394 = vpop.permute.xlu0 %393
    %395 = vrot.lane.b32.xlu0 %v392, 127
    %v396 = vpop.permute.xlu0 %395
    %v397 = vrot.slane %v394, 4
    %v398 = vrot.slane %v396, 4
    %vm399 = vcmask 1039360
    %v400 = vsel %vm399, %v397, %v394
    %v401 = vsel %vm205, %v397, %v398
    %v402 = vsel %vm399, %v401, %v396
    %vm403 = vcmp.ne.s16.totalorder %v400, 0
    %vm404 = vcmp.ne.s16.totalorder %v402, 0
    %vm405 = vcmp.ne.s16.totalorder %v398, 0
    %v406 = vsel %vm403, %v365, 0
    %v407 = vsel %vm404, %v366, 0
    %v408 = vsel %vm405, %v367, 0
    %412 = vrot.lane.b32.xlu0 %v406, 1
    %v413 = vpop.permute.xlu0 %412
    %414 = vrot.lane.b32.xlu0 %v407, 1
    %v415 = vpop.permute.xlu0 %414
    %416 = vrot.lane.b32.xlu0 %v408, 1
    %v417 = vpop.permute.xlu0 %416
    %v418 = vrot.slane %v413, 4
    %v419 = vrot.slane %v415, 4
    %v420 = vrot.slane %v417, 4
    %v421 = vsel %vm205, %v418, %v419
    %vm422 = vcmask 7168
    %v423 = vsel %vm422, %v413, %v421
    %v424 = vsel %vm205, %v419, %v420
    %v425 = vsel %vm422, %v415, %v424
    %428 = vst [vmem:[#allocation3 + $0x30] sm:$0xff] %v423
    %429 = vst [vmem:[#allocation3 + $0x38] sm:$0xff] %v425
    %v430 = vld [vmem:[#allocation2 + $0x4] sm:$0xff]
    %v431 = vld [vmem:[#allocation2 + $0xc] sm:$0xff]
    %v432 = vsel %vm156, 1, 0
    %v433 = vlaneseq
    %v434 = vshrl.u32 %v433, 7
    %v435 = vsub.s32 0, %v434
    %v436 = vrot.slane %v432, %v435
    %v437 = vlaneseq
    %v438 = vshrl.u32 %v437, 7
    %v439 = vsub.s32 1, %v438
    %v440 = vrot.slane %v432, %v439
    %v441 = vlaneseq
    %v442 = vshrl.u32 %v441, 7
    %v443 = vsub.s32 2, %v442
    %v444 = vrot.slane %v432, %v443
    %v445 = vlaneseq
    %v446 = vshrl.u32 %v445, 7
    %v447 = vsub.s32 3, %v446
    %v448 = vrot.slane %v432, %v447
    %vm449 = vcmp.eq.s32.totalorder %v436, 1
    %vm450 = vcmp.eq.s32.totalorder %v440, 1
    %vm451 = vcmp.eq.s32.totalorder %v444, 1
    %vm452 = vcmp.eq.s32.totalorder %v448, 1
    %vm453 = vmpackc.low %vm450, %vm449
    %vm454 = vmpackc.low %vm452, %vm451
    %v455 = vsel %vm453, %v430, 0
    %v456 = vsel %vm454, %v431, 0
    %457 = vst [vmem:[#allocation3 + $0x40] sm:$0xff] %v455
    %458 = vst [vmem:[#allocation3 + $0x48] sm:$0xff] %v456
    %v459 = vld [vmem:[#allocation2 + $0x4] sm:$0xff]
    %v460 = vld [vmem:[#allocation2 + $0xc] sm:$0xff]
    %v461 = vld [vmem:[#allocation2 + $0x14] sm:$0xf]
    %v462 = vsel %vm159, 1, 0
    %v463 = vlaneseq
    %v464 = vshrl.u32 %v463, 7
    %v465 = vsub.s32 0, %v464
    %v466 = vrot.slane %v462, %v465
    %v467 = vlaneseq
    %v468 = vshrl.u32 %v467, 7
    %v469 = vsub.s32 1, %v468
    %v470 = vrot.slane %v462, %v469
    %v471 = vlaneseq
    %v472 = vshrl.u32 %v471, 7
    %v473 = vsub.s32 2, %v472
    %v474 = vrot.slane %v462, %v473
    %v475 = vlaneseq
    %v476 = vshrl.u32 %v475, 7
    %v477 = vsub.s32 3, %v476
    %v478 = vrot.slane %v462, %v477
    %vm479 = vcmp.eq.s32.totalorder %v466, 1
    %vm480 = vcmp.eq.s32.totalorder %v470, 1
    %vm481 = vcmp.eq.s32.totalorder %v474, 1
    %vm482 = vcmp.eq.s32.totalorder %v478, 1
    %vm483 = vmpackc.low %vm480, %vm479
    %vm484 = vmpackc.low %vm482, %vm481
    %v485 = vsel %vm483, 65537, 0
    %v486 = vsel %vm484, 65537, 0
    %487 = vrot.lane.b32.xlu0 %v485, 1
    %v488 = vpop.permute.xlu0 %487
    %489 = vrot.lane.b32.xlu0 %v486, 1
    %v490 = vpop.permute.xlu0 %489
    %v491 = vrot.slane %v488, 4
    %v492 = vrot.slane %v490, 4
    %v493 = vsel %vm422, %v491, %v488
    %v494 = vsel %vm205, %v491, %v492
    %v495 = vsel %vm422, %v494, %v490
    %vm496 = vcmp.ne.s16.totalorder %v493, 0
    %vm497 = vcmp.ne.s16.totalorder %v495, 0
    %vm498 = vcmp.ne.s16.totalorder %v492, 0
    %v499 = vsel %vm496, %v459, 0
    %v500 = vsel %vm497, %v460, 0
    %v501 = vsel %vm498, %v461, 0
    %505 = vrot.lane.b32.xlu0 %v499, 127
    %v506 = vpop.permute.xlu0 %505
    %507 = vrot.lane.b32.xlu0 %v500, 127
    %v508 = vpop.permute.xlu0 %507
    %509 = vrot.lane.b32.xlu0 %v501, 127
    %v510 = vpop.permute.xlu0 %509
    %v511 = vrot.slane %v506, 4
    %v512 = vrot.slane %v508, 4
    %v513 = vrot.slane %v510, 4
    %v514 = vsel %vm205, %v511, %v512
    %v515 = vsel %vm399, %v506, %v514
    %v516 = vsel %vm205, %v512, %v513
    %v517 = vsel %vm399, %v508, %v516
    %520 = vst [vmem:[#allocation3 + $0x50] sm:$0xff] %v515
    %521 = vst [vmem:[#allocation3 + $0x58] sm:$0xff] %v517
    %v522 = vld [vmem:[#allocation2 + $0x4] sm:$0xff]
    %v523 = vld [vmem:[#allocation2 + $0xc] sm:$0xff]
    %v524 = vld [vmem:[#allocation2 + $0x14] sm:$0xf]
    %v525 = vsel %vm162, 1, 0
    %v526 = vlaneseq
    %v527 = vshrl.u32 %v526, 7
    %v528 = vsub.s32 0, %v527
    %v529 = vrot.slane %v525, %v528
    %v530 = vlaneseq
    %v531 = vshrl.u32 %v530, 7
    %v532 = vsub.s32 1, %v531
    %v533 = vrot.slane %v525, %v532
    %v534 = vlaneseq
    %v535 = vshrl.u32 %v534, 7
    %v536 = vsub.s32 2, %v535
    %v537 = vrot.slane %v525, %v536
    %v538 = vlaneseq
    %v539 = vshrl.u32 %v538, 7
    %v540 = vsub.s32 3, %v539
    %v541 = vrot.slane %v525, %v540
    %vm542 = vcmp.eq.s32.totalorder %v529, 1
    %vm543 = vcmp.eq.s32.totalorder %v533, 1
    %vm544 = vcmp.eq.s32.totalorder %v537, 1
    %vm545 = vcmp.eq.s32.totalorder %v541, 1
    %vm546 = vmpackc.low %vm543, %vm542
    %vm547 = vmpackc.low %vm545, %vm544
    %v548 = vsel %vm546, 65537, 0
    %v549 = vsel %vm547, 65537, 0
    %550 = vrot.lane.b32.xlu0 %v548, 15
    %v551 = vpop.permute.xlu0 %550
    %552 = vrot.lane.b32.xlu0 %v549, 15
    %v553 = vpop.permute.xlu0 %552
    %v554 = vrot.slane %v551, 4
    %v555 = vrot.slane %v553, 4
    %v556 = vsel %vm357, %v554, %v551
    %v557 = vsel %vm205, %v554, %v555
    %v558 = vsel %vm357, %v557, %v553
    %vm559 = vcmp.ne.s16.totalorder %v556, 0
    %vm560 = vcmp.ne.s16.totalorder %v558, 0
    %vm561 = vcmp.ne.s16.totalorder %v555, 0
    %v562 = vsel %vm559, %v522, 0
    %v563 = vsel %vm560, %v523, 0
    %v564 = vsel %vm561, %v524, 0
    %568 = vrot.lane.b32.xlu0 %v562, 113
    %v569 = vpop.permute.xlu0 %568
    %570 = vrot.lane.b32.xlu0 %v563, 113
    %v571 = vpop.permute.xlu0 %570
    %572 = vrot.lane.b32.xlu0 %v564, 113
    %v573 = vpop.permute.xlu0 %572
    %v574 = vrot.slane %v569, 4
    %v575 = vrot.slane %v571, 4
    %v576 = vrot.slane %v573, 4
    %v577 = vsel %vm205, %v574, %v575
    %v578 = vsel %vm334, %v569, %v577
    %v579 = vsel %vm205, %v575, %v576
    %v580 = vsel %vm334, %v571, %v579
    %583 = vst [vmem:[#allocation3 + $0x60] sm:$0xff] %v578
    %584 = vst [vmem:[#allocation3 + $0x68] sm:$0xff] %v580
    %v585 = vld [vmem:[#allocation2 + $0x4] sm:$0xff]
    %v586 = vld [vmem:[#allocation2 + $0xc] sm:$0xff]
    %v587 = vld [vmem:[#allocation2 + $0x14] sm:$0xf]
    %v588 = vsel %vm165, 1, 0
    %v589 = vlaneseq
    %v590 = vshrl.u32 %v589, 7
    %v591 = vsub.s32 0, %v590
    %v592 = vrot.slane %v588, %v591
    %v593 = vlaneseq
    %v594 = vshrl.u32 %v593, 7
    %v595 = vsub.s32 1, %v594
    %v596 = vrot.slane %v588, %v595
    %v597 = vlaneseq
    %v598 = vshrl.u32 %v597, 7
    %v599 = vsub.s32 2, %v598
    %v600 = vrot.slane %v588, %v599
    %v601 = vlaneseq
    %v602 = vshrl.u32 %v601, 7
    %v603 = vsub.s32 3, %v602
    %v604 = vrot.slane %v588, %v603
    %vm605 = vcmp.eq.s32.totalorder %v592, 1
    %vm606 = vcmp.eq.s32.totalorder %v596, 1
    %vm607 = vcmp.eq.s32.totalorder %v600, 1
    %vm608 = vcmp.eq.s32.totalorder %v604, 1
    %vm609 = vmpackc.low %vm606, %vm605
    %vm610 = vmpackc.low %vm608, %vm607
    %v611 = vsel %vm609, 65537, 0
    %v612 = vsel %vm610, 65537, 0
    %613 = vrot.lane.b32.xlu0 %v611, 16
    %v614 = vpop.permute.xlu0 %613
    %615 = vrot.lane.b32.xlu0 %v612, 16
    %v616 = vpop.permute.xlu0 %615
    %v617 = vrot.slane %v614, 4
    %v618 = vrot.slane %v616, 4
    %v619 = vsel %vm292, %v617, %v614
    %v620 = vsel %vm205, %v617, %v618
    %v621 = vsel %vm292, %v620, %v616
    %vm622 = vcmp.ne.s16.totalorder %v619, 0
    %vm623 = vcmp.ne.s16.totalorder %v621, 0
    %vm624 = vcmp.ne.s16.totalorder %v618, 0
    %v625 = vsel %vm622, %v585, 0
    %v626 = vsel %vm623, %v586, 0
    %v627 = vsel %vm624, %v587, 0
    %631 = vrot.lane.b32.xlu0 %v625, 112
    %v632 = vpop.permute.xlu0 %631
    %633 = vrot.lane.b32.xlu0 %v626, 112
    %v634 = vpop.permute.xlu0 %633
    %635 = vrot.lane.b32.xlu0 %v627, 112
    %v636 = vpop.permute.xlu0 %635
    %v637 = vrot.slane %v632, 4
    %v638 = vrot.slane %v634, 4
    %v639 = vrot.slane %v636, 4
    %v640 = vsel %vm205, %v637, %v638
    %v641 = vsel %vm269, %v632, %v640
    %v642 = vsel %vm205, %v638, %v639
    %v643 = vsel %vm269, %v634, %v642
    %646 = vst [vmem:[#allocation3 + $0x70] sm:$0xff] %v641
    %647 = vst [vmem:[#allocation3 + $0x78] sm:$0xff] %v643
    %v648 = vld [vmem:[#allocation2 + $0x4] sm:$0xff]
    %v649 = vld [vmem:[#allocation2 + $0xc] sm:$0xff]
    %v650 = vld [vmem:[#allocation2 + $0x14] sm:$0xf]
    %v651 = vsel %vm168, 1, 0
    %v652 = vlaneseq
    %v653 = vshrl.u32 %v652, 7
    %v654 = vsub.s32 0, %v653
    %v655 = vrot.slane %v651, %v654
    %v656 = vlaneseq
    %v657 = vshrl.u32 %v656, 7
    %v658 = vsub.s32 1, %v657
    %v659 = vrot.slane %v651, %v658
    %v660 = vlaneseq
    %v661 = vshrl.u32 %v660, 7
    %v662 = vsub.s32 2, %v661
    %v663 = vrot.slane %v651, %v662
    %v664 = vlaneseq
    %v665 = vshrl.u32 %v664, 7
    %v666 = vsub.s32 3, %v665
    %v667 = vrot.slane %v651, %v666
    %vm668 = vcmp.eq.s32.totalorder %v655, 1
    %vm669 = vcmp.eq.s32.totalorder %v659, 1
    %vm670 = vcmp.eq.s32.totalorder %v663, 1
    %vm671 = vcmp.eq.s32.totalorder %v667, 1
    %vm672 = vmpackc.low %vm669, %vm668
    %vm673 = vmpackc.low %vm671, %vm670
    %v674 = vsel %vm672, 65537, 0
    %v675 = vsel %vm673, 65537, 0
    %676 = vrot.lane.b32.xlu0 %v674, 17
    %v677 = vpop.permute.xlu0 %676
    %678 = vrot.lane.b32.xlu0 %v675, 17
    %v679 = vpop.permute.xlu0 %678
    %v680 = vrot.slane %v677, 4
    %v681 = vrot.slane %v679, 4
    %v682 = vsel %vm227, %v680, %v677
    %v683 = vsel %vm205, %v680, %v681
    %v684 = vsel %vm227, %v683, %v679
    %vm685 = vcmp.ne.s16.totalorder %v682, 0
    %vm686 = vcmp.ne.s16.totalorder %v684, 0
    %vm687 = vcmp.ne.s16.totalorder %v681, 0
    %v688 = vsel %vm685, %v648, 0
    %v689 = vsel %vm686, %v649, 0
    %v690 = vsel %vm687, %v650, 0
    %694 = vrot.lane.b32.xlu0 %v688, 111
    %v695 = vpop.permute.xlu0 %694
    %696 = vrot.lane.b32.xlu0 %v689, 111
    %v697 = vpop.permute.xlu0 %696
    %698 = vrot.lane.b32.xlu0 %v690, 111
    %v699 = vpop.permute.xlu0 %698
    %v700 = vrot.slane %v695, 4
    %v701 = vrot.slane %v697, 4
    %v702 = vrot.slane %v699, 4
    %v703 = vsel %vm205, %v700, %v701
    %v704 = vsel %vm203, %v695, %v703
    %v705 = vsel %vm205, %v701, %v702
    %v706 = vsel %vm203, %v697, %v705
    %709 = vst [vmem:[#allocation3 + $0x80] sm:$0xff] %v704
    %710 = vst [vmem:[#allocation3 + $0x88] sm:$0xff] %v706
    %v711 = vld [vmem:[%s3] sm:$0xf]
    %v712 = vld [vmem:[#allocation3] sm:$0xff]
    %v713 = vld [vmem:[#allocation3 + $0x8] sm:$0xff]
    %v714 = vld [vmem:[#allocation3 + $0x10] sm:$0xff]
    %v715 = vld [vmem:[#allocation3 + $0x18] sm:$0xff]
    %v716 = vld [vmem:[#allocation3 + $0x20] sm:$0xff]
    %v717 = vld [vmem:[#allocation3 + $0x28] sm:$0xff]
    %v718 = vld [vmem:[#allocation3 + $0x30] sm:$0xff]
    %v719 = vld [vmem:[#allocation3 + $0x38] sm:$0xff]
    %v720 = vld [vmem:[#allocation3 + $0x40] sm:$0xff]
    %v721 = vld [vmem:[#allocation3 + $0x48] sm:$0xff]
    %v722 = vld [vmem:[#allocation3 + $0x50] sm:$0xff]
    %v723 = vld [vmem:[#allocation3 + $0x58] sm:$0xff]
    %v724 = vld [vmem:[#allocation3 + $0x60] sm:$0xff]
    %v725 = vld [vmem:[#allocation3 + $0x68] sm:$0xff]
    %v726 = vld [vmem:[#allocation3 + $0x70] sm:$0xff]
    %v727 = vld [vmem:[#allocation3 + $0x78] sm:$0xff]
    %v728 = vld [vmem:[#allocation3 + $0x80] sm:$0xff]
    %v729 = vld [vmem:[#allocation3 + $0x88] sm:$0xff]
    %v730 = vld [vmem:[%s4] sm:$0xff]
    %732 = vset.pattern.permute.xlu0 0
    %733 = vperm.xlu0 %732, %v730
    %v734 = vpop.permute.xlu0 %733
    %v754 = vunpack.c.l.b16 %v712
    %v755 = vunpack.c.h.b16 %v712
    %v756 = vunpack.c.l.b16 %v713
    %v757 = vunpack.c.h.b16 %v713
    %v758 = vunpack.c.l.b16 %v714
    %v759 = vunpack.c.h.b16 %v714
    %v760 = vunpack.c.l.b16 %v715
    %v761 = vunpack.c.h.b16 %v715
    %v762 = vunpack.c.l.b16 %v716
    %v763 = vunpack.c.h.b16 %v716
    %v764 = vunpack.c.l.b16 %v717
    %v765 = vunpack.c.h.b16 %v717
    %v766 = vunpack.c.l.b16 %v718
    %v767 = vunpack.c.h.b16 %v718
    %v768 = vunpack.c.l.b16 %v719
    %v769 = vunpack.c.h.b16 %v719
    %v770 = vunpack.c.l.b16 %v720
    %v771 = vunpack.c.h.b16 %v720
    %v772 = vunpack.c.l.b16 %v721
    %v773 = vunpack.c.h.b16 %v721
    %v774 = vunpack.c.l.b16 %v722
    %v775 = vunpack.c.h.b16 %v722
    %v776 = vunpack.c.l.b16 %v723
    %v777 = vunpack.c.h.b16 %v723
    %v778 = vunpack.c.l.b16 %v724
    %v779 = vunpack.c.h.b16 %v724
    %v780 = vunpack.c.l.b16 %v725
    %v781 = vunpack.c.h.b16 %v725
    %v782 = vunpack.c.l.b16 %v726
    %v783 = vunpack.c.h.b16 %v726
    %v784 = vunpack.c.l.b16 %v727
    %v785 = vunpack.c.h.b16 %v727
    %v786 = vunpack.c.l.b16 %v728
    %v787 = vunpack.c.h.b16 %v728
    %v788 = vunpack.c.l.b16 %v729
    %v789 = vunpack.c.h.b16 %v729
    %v790 = vpack.c.b16 %v758, %v754
    %v791 = vpack.c.b16 %v759, %v755
    %v792 = vpack.c.b16 %v760, %v756
    %v793 = vpack.c.b16 %v761, %v757
    %v794 = vpack.c.b16 %v766, %v762
    %v795 = vpack.c.b16 %v767, %v763
    %v796 = vpack.c.b16 %v768, %v764
    %v797 = vpack.c.b16 %v769, %v765
    %v798 = vpack.c.b16 %v774, %v770
    %v799 = vpack.c.b16 %v775, %v771
    %v800 = vpack.c.b16 %v776, %v772
    %v801 = vpack.c.b16 %v777, %v773
    %v802 = vpack.c.b16 %v782, %v778
    %v803 = vpack.c.b16 %v783, %v779
    %v804 = vpack.c.b16 %v784, %v780
    %v805 = vpack.c.b16 %v785, %v781
    %v806 = vpack.c.b16 %v786, %v786
    %v807 = vpack.c.b16 %v787, %v787
    %v808 = vpack.c.b16 %v788, %v788
    %v809 = vpack.c.b16 %v789, %v789
    %vm826 = vcmask 588800
    %v828 = vsel %vm826, %v711, 0
    %vm830 = vcmask 1043456
    %v832 = vsel %vm830, %v806, 0
    %v835 = vsel %vm830, %v807, 0
    %v838 = vsel %vm830, %v808, 0
    %v841 = vsel %vm830, %v809, 0
    %843 = vmatprep.subr.bf16.mxu0 %v791
    %844 = vmatpush1.bf16.msra.mxu0 %v790
    %845 = vmatprep.subr.bf16.mxu0 %v795
    %846 = vmatpush1.bf16.msra.mxu0 %v794
    %847 = vmatprep.subr.bf16.mxu0 %v799
    %848 = vmatpush1.bf16.msra.mxu0 %v798
    %849 = vmatprep.subr.bf16.mxu0 %v803
    %850 = vmatpush1.bf16.msra.mxu0 %v802
    %851 = vmatprep.subr.bf16.mxu0 %v835
    %852 = vmatpush1.bf16.msra.mxu0 %v832
    %853 = vmatprep.subr.bf16.mxu0 0
    %854 = vmatpush1.bf16.msra.mxu0 0
    %855 = vmatprep.subr.bf16.mxu0 0
    %856 = vmatpush1.bf16.msra.mxu0 0
    %857 = vmatprep.subr.bf16.mxu0 0
    %858 = vmatpush1.bf16.msra.mxu0 0
    %859 = vmatprep.subr.bf16.mxu0 0
    %860 = vmatpush1.bf16.msra.mxu0 0
    %861 = vmatprep.subr.bf16.mxu0 0
    %862 = vmatpush1.bf16.msra.mxu0 0
    %863 = vmatprep.subr.bf16.mxu0 0
    %864 = vmatpush1.bf16.msra.mxu0 0
    %865 = vmatprep.subr.bf16.mxu0 0
    %866 = vmatpush1.bf16.msra.mxu0 0
    %867 = vmatprep.subr.bf16.mxu0 0
    %868 = vmatpush1.bf16.msra.mxu0 0
    %869 = vmatprep.subr.bf16.mxu0 0
    %870 = vmatpush1.bf16.msra.mxu0 0
    %871 = vmatprep.subr.bf16.mxu0 0
    %872 = vmatpush1.bf16.msra.mxu0 0
    %873 = vmatprep.subr.bf16.mxu0 0
    %874 = vmatpush1.bf16.msra.mxu0 0
    %875 = vmatprep.mubr.bf16.mxu0 0
    %876 = vmatmul.mubr.bf16.gmra.mrb[0].mxu0 %v828
    %v877 = vpop.f32.mrb[0].mxu0
    %v878 = vadd.f32 %v734, %v877
    %v879 = vpop.f32.mrb[0].mxu0
    %v880 = vadd.f32 %v734, %v879
    %v881 = vpop.f32.mrb[0].mxu0
    %v882 = vpop.f32.mrb[0].mxu0
    %883 = vdwg.mxu0
    %884 = vmatprep.subr.bf16.mxu0 %v793
    %885 = vmatpush1.bf16.msra.mxu0 %v792
    %886 = vmatprep.subr.bf16.mxu0 %v797
    %887 = vmatpush1.bf16.msra.mxu0 %v796
    %888 = vmatprep.subr.bf16.mxu0 %v801
    %889 = vmatpush1.bf16.msra.mxu0 %v800
    %890 = vmatprep.subr.bf16.mxu0 %v805
    %891 = vmatpush1.bf16.msra.mxu0 %v804
    %892 = vmatprep.subr.bf16.mxu0 %v841
    %893 = vmatpush1.bf16.msra.mxu0 %v838
    %894 = vmatprep.subr.bf16.mxu0 0
    %895 = vmatpush1.bf16.msra.mxu0 0
    %896 = vmatprep.subr.bf16.mxu0 0
    %897 = vmatpush1.bf16.msra.mxu0 0
    %898 = vmatprep.subr.bf16.mxu0 0
    %899 = vmatpush1.bf16.msra.mxu0 0
    %900 = vmatprep.subr.bf16.mxu0 0
    %901 = vmatpush1.bf16.msra.mxu0 0
    %902 = vmatprep.subr.bf16.mxu0 0
    %903 = vmatpush1.bf16.msra.mxu0 0
    %904 = vmatprep.subr.bf16.mxu0 0
    %905 = vmatpush1.bf16.msra.mxu0 0
    %906 = vmatprep.subr.bf16.mxu0 0
    %907 = vmatpush1.bf16.msra.mxu0 0
    %908 = vmatprep.subr.bf16.mxu0 0
    %909 = vmatpush1.bf16.msra.mxu0 0
    %910 = vmatprep.subr.bf16.mxu0 0
    %911 = vmatpush1.bf16.msra.mxu0 0
    %912 = vmatprep.subr.bf16.mxu0 0
    %913 = vmatpush1.bf16.msra.mxu0 0
    %914 = vmatprep.subr.bf16.mxu0 0
    %915 = vmatpush1.bf16.msra.mxu0 0
    %916 = vmatprep.mubr.bf16.mxu0 0
    %917 = vmatmul.mubr.bf16.gmra.mrb[0].mxu0 %v828
    %v918 = vpop.f32.mrb[0].mxu0
    %v919 = vadd.f32 %v734, %v918
    %v920 = vpop.f32.mrb[0].mxu0
    %v921 = vadd.f32 %v734, %v920
    %v922 = vpop.f32.mrb[0].mxu0
    %v923 = vpop.f32.mrb[0].mxu0
    %924 = vdwg.mxu0
    %v925 = vmul.f32 %v878, 0.2
    %v926 = vmul.f32 %v880, 0.2
    %v927 = vmul.f32 %v919, 0.2
    %v928 = vmul.f32 %v921, 0.2
    %v929 = vmax.f32 %v878, %v925
    %v930 = vmax.f32 %v880, %v926
    %v931 = vmax.f32 %v919, %v927
    %v932 = vmax.f32 %v921, %v928
    %v933 = vpack.c.bf16 %v929, %v929
    %v934 = vpack.c.bf16 %v930, %v930
    %v935 = vpack.c.bf16 %v931, %v931
    %v936 = vpack.c.bf16 %v932, %v932
    %v941 = vunpack.c.l.b16 %v933
    %v942 = vunpack.c.l.b16 %v934
    %v943 = vunpack.c.l.b16 %v935
    %v944 = vunpack.c.l.b16 %v936
    %v945 = vpack.c.b16 %v942, %v941
    %v946 = vpack.c.b16 %v944, %v943
    %949 = vst [vmem:[#allocation4 + $0x4] sm:$0xff] %v945
    %950 = vst [vmem:[#allocation4 + $0xc] sm:$0xff] %v946
    %v951 = vld [vmem:[#allocation4] sm:$0xff]
    %v952 = vld [vmem:[#allocation4 + $0x8] sm:$0xff]
    %v953 = vld [vmem:[#allocation4 + $0x10] sm:$0xf]
    %v954 = vsel %vm208, %v951, 0
    %v955 = vsel %vm209, %v952, 0
    %v956 = vsel %vm210, %v953, 0
    %960 = vrot.lane.b32.xlu0 %v954, 17
    %v961 = vpop.permute.xlu0 %960
    %962 = vrot.lane.b32.xlu0 %v955, 17
    %v963 = vpop.permute.xlu0 %962
    %964 = vrot.lane.b32.xlu0 %v956, 17
    %v965 = vpop.permute.xlu0 %964
    %v966 = vrot.slane %v961, 4
    %v967 = vrot.slane %v963, 4
    %v968 = vrot.slane %v965, 4
    %v969 = vsel %vm205, %v966, %v967
    %v970 = vsel %vm227, %v961, %v969
    %v971 = vsel %vm205, %v967, %v968
    %v972 = vsel %vm227, %v963, %v971
    %975 = vst [vmem:[#allocation5] sm:$0xff] %v970
    %976 = vst [vmem:[#allocation5 + $0x8] sm:$0xff] %v972
    %v977 = vld [vmem:[#allocation4] sm:$0xff]
    %v978 = vld [vmem:[#allocation4 + $0x8] sm:$0xff]
    %v979 = vld [vmem:[#allocation4 + $0x10] sm:$0xf]
    %v980 = vsel %vm273, %v977, 0
    %v981 = vsel %vm274, %v978, 0
    %v982 = vsel %vm275, %v979, 0
    %986 = vrot.lane.b32.xlu0 %v980, 16
    %v987 = vpop.permute.xlu0 %986
    %988 = vrot.lane.b32.xlu0 %v981, 16
    %v989 = vpop.permute.xlu0 %988
    %990 = vrot.lane.b32.xlu0 %v982, 16
    %v991 = vpop.permute.xlu0 %990
    %v992 = vrot.slane %v987, 4
    %v993 = vrot.slane %v989, 4
    %v994 = vrot.slane %v991, 4
    %v995 = vsel %vm205, %v992, %v993
    %v996 = vsel %vm292, %v987, %v995
    %v997 = vsel %vm205, %v993, %v994
    %v998 = vsel %vm292, %v989, %v997
    %1001 = vst [vmem:[#allocation5 + $0x10] sm:$0xff] %v996
    %1002 = vst [vmem:[#allocation5 + $0x18] sm:$0xff] %v998
    %v1003 = vld [vmem:[#allocation4] sm:$0xff]
    %v1004 = vld [vmem:[#allocation4 + $0x8] sm:$0xff]
    %v1005 = vld [vmem:[#allocation4 + $0x10] sm:$0xf]
    %v1006 = vsel %vm338, %v1003, 0
    %v1007 = vsel %vm339, %v1004, 0
    %v1008 = vsel %vm340, %v1005, 0
    %1012 = vrot.lane.b32.xlu0 %v1006, 15
    %v1013 = vpop.permute.xlu0 %1012
    %1014 = vrot.lane.b32.xlu0 %v1007, 15
    %v1015 = vpop.permute.xlu0 %1014
    %1016 = vrot.lane.b32.xlu0 %v1008, 15
    %v1017 = vpop.permute.xlu0 %1016
    %v1018 = vrot.slane %v1013, 4
    %v1019 = vrot.slane %v1015, 4
    %v1020 = vrot.slane %v1017, 4
    %v1021 = vsel %vm205, %v1018, %v1019
    %v1022 = vsel %vm357, %v1013, %v1021
    %v1023 = vsel %vm205, %v1019, %v1020
    %v1024 = vsel %vm357, %v1015, %v1023
    %1027 = vst [vmem:[#allocation5 + $0x20] sm:$0xff] %v1022
    %1028 = vst [vmem:[#allocation5 + $0x28] sm:$0xff] %v1024
    %v1029 = vld [vmem:[#allocation4] sm:$0xff]
    %v1030 = vld [vmem:[#allocation4 + $0x8] sm:$0xff]
    %v1031 = vld [vmem:[#allocation4 + $0x10] sm:$0xf]
    %v1032 = vsel %vm403, %v1029, 0
    %v1033 = vsel %vm404, %v1030, 0
    %v1034 = vsel %vm405, %v1031, 0
    %1038 = vrot.lane.b32.xlu0 %v1032, 1
    %v1039 = vpop.permute.xlu0 %1038
    %1040 = vrot.lane.b32.xlu0 %v1033, 1
    %v1041 = vpop.permute.xlu0 %1040
    %1042 = vrot.lane.b32.xlu0 %v1034, 1
    %v1043 = vpop.permute.xlu0 %1042
    %v1044 = vrot.slane %v1039, 4
    %v1045 = vrot.slane %v1041, 4
    %v1046 = vrot.slane %v1043, 4
    %v1047 = vsel %vm205, %v1044, %v1045
    %v1048 = vsel %vm422, %v1039, %v1047
    %v1049 = vsel %vm205, %v1045, %v1046
    %v1050 = vsel %vm422, %v1041, %v1049
    %1053 = vst [vmem:[#allocation5 + $0x30] sm:$0xff] %v1048
    %1054 = vst [vmem:[#allocation5 + $0x38] sm:$0xff] %v1050
    %v1055 = vld [vmem:[#allocation4 + $0x4] sm:$0xff]
    %v1056 = vld [vmem:[#allocation4 + $0xc] sm:$0xff]
    %v1057 = vsel %vm453, %v1055, 0
    %v1058 = vsel %vm454, %v1056, 0
    %1059 = vst [vmem:[#allocation5 + $0x40] sm:$0xff] %v1057
    %1060 = vst [vmem:[#allocation5 + $0x48] sm:$0xff] %v1058
    %v1061 = vld [vmem:[#allocation4 + $0x4] sm:$0xff]
    %v1062 = vld [vmem:[#allocation4 + $0xc] sm:$0xff]
    %v1063 = vld [vmem:[#allocation4 + $0x14] sm:$0xf]
    %v1064 = vsel %vm496, %v1061, 0
    %v1065 = vsel %vm497, %v1062, 0
    %v1066 = vsel %vm498, %v1063, 0
    %1070 = vrot.lane.b32.xlu0 %v1064, 127
    %v1071 = vpop.permute.xlu0 %1070
    %1072 = vrot.lane.b32.xlu0 %v1065, 127
    %v1073 = vpop.permute.xlu0 %1072
    %1074 = vrot.lane.b32.xlu0 %v1066, 127
    %v1075 = vpop.permute.xlu0 %1074
    %v1076 = vrot.slane %v1071, 4
    %v1077 = vrot.slane %v1073, 4
    %v1078 = vrot.slane %v1075, 4
    %v1079 = vsel %vm205, %v1076, %v1077
    %v1080 = vsel %vm399, %v1071, %v1079
    %v1081 = vsel %vm205, %v1077, %v1078
    %v1082 = vsel %vm399, %v1073, %v1081
    %1085 = vst [vmem:[#allocation5 + $0x50] sm:$0xff] %v1080
    %1086 = vst [vmem:[#allocation5 + $0x58] sm:$0xff] %v1082
    %v1087 = vld [vmem:[#allocation4 + $0x4] sm:$0xff]
    %v1088 = vld [vmem:[#allocation4 + $0xc] sm:$0xff]
    %v1089 = vld [vmem:[#allocation4 + $0x14] sm:$0xf]
    %v1090 = vsel %vm559, %v1087, 0
    %v1091 = vsel %vm560, %v1088, 0
    %v1092 = vsel %vm561, %v1089, 0
    %1096 = vrot.lane.b32.xlu0 %v1090, 113
    %v1097 = vpop.permute.xlu0 %1096
    %1098 = vrot.lane.b32.xlu0 %v1091, 113
    %v1099 = vpop.permute.xlu0 %1098
    %1100 = vrot.lane.b32.xlu0 %v1092, 113
    %v1101 = vpop.permute.xlu0 %1100
    %v1102 = vrot.slane %v1097, 4
    %v1103 = vrot.slane %v1099, 4
    %v1104 = vrot.slane %v1101, 4
    %v1105 = vsel %vm205, %v1102, %v1103
    %v1106 = vsel %vm334, %v1097, %v1105
    %v1107 = vsel %vm205, %v1103, %v1104
    %v1108 = vsel %vm334, %v1099, %v1107
    %1111 = vst [vmem:[#allocation5 + $0x60] sm:$0xff] %v1106
    %1112 = vst [vmem:[#allocation5 + $0x68] sm:$0xff] %v1108
    %v1113 = vld [vmem:[#allocation4 + $0x4] sm:$0xff]
    %v1114 = vld [vmem:[#allocation4 + $0xc] sm:$0xff]
    %v1115 = vld [vmem:[#allocation4 + $0x14] sm:$0xf]
    %v1116 = vsel %vm622, %v1113, 0
    %v1117 = vsel %vm623, %v1114, 0
    %v1118 = vsel %vm624, %v1115, 0
    %1122 = vrot.lane.b32.xlu0 %v1116, 112
    %v1123 = vpop.permute.xlu0 %1122
    %1124 = vrot.lane.b32.xlu0 %v1117, 112
    %v1125 = vpop.permute.xlu0 %1124
    %1126 = vrot.lane.b32.xlu0 %v1118, 112
    %v1127 = vpop.permute.xlu0 %1126
    %v1128 = vrot.slane %v1123, 4
    %v1129 = vrot.slane %v1125, 4
    %v1130 = vrot.slane %v1127, 4
    %v1131 = vsel %vm205, %v1128, %v1129
    %v1132 = vsel %vm269, %v1123, %v1131
    %v1133 = vsel %vm205, %v1129, %v1130
    %v1134 = vsel %vm269, %v1125, %v1133
    %1137 = vst [vmem:[#allocation5 + $0x70] sm:$0xff] %v1132
    %1138 = vst [vmem:[#allocation5 + $0x78] sm:$0xff] %v1134
    %v1139 = vld [vmem:[#allocation4 + $0x4] sm:$0xff]
    %v1140 = vld [vmem:[#allocation4 + $0xc] sm:$0xff]
    %v1141 = vld [vmem:[#allocation4 + $0x14] sm:$0xf]
    %v1142 = vsel %vm685, %v1139, 0
    %v1143 = vsel %vm686, %v1140, 0
    %v1144 = vsel %vm687, %v1141, 0
    %1148 = vrot.lane.b32.xlu0 %v1142, 111
    %v1149 = vpop.permute.xlu0 %1148
    %1150 = vrot.lane.b32.xlu0 %v1143, 111
    %v1151 = vpop.permute.xlu0 %1150
    %1152 = vrot.lane.b32.xlu0 %v1144, 111
    %v1153 = vpop.permute.xlu0 %1152
    %v1154 = vrot.slane %v1149, 4
    %v1155 = vrot.slane %v1151, 4
    %v1156 = vrot.slane %v1153, 4
    %v1157 = vsel %vm205, %v1154, %v1155
    %v1158 = vsel %vm203, %v1149, %v1157
    %v1159 = vsel %vm205, %v1155, %v1156
    %v1160 = vsel %vm203, %v1151, %v1159
    %1163 = vst [vmem:[#allocation5 + $0x80] sm:$0xff] %v1158
    %1164 = vst [vmem:[#allocation5 + $0x88] sm:$0xff] %v1160
    %v1165 = vld [vmem:[%s5] sm:$0xf]
    %v1166 = vld [vmem:[#allocation5] sm:$0xff]
    %v1167 = vld [vmem:[#allocation5 + $0x8] sm:$0xff]
    %v1168 = vld [vmem:[#allocation5 + $0x10] sm:$0xff]
    %v1169 = vld [vmem:[#allocation5 + $0x18] sm:$0xff]
    %v1170 = vld [vmem:[#allocation5 + $0x20] sm:$0xff]
    %v1171 = vld [vmem:[#allocation5 + $0x28] sm:$0xff]
    %v1172 = vld [vmem:[#allocation5 + $0x30] sm:$0xff]
    %v1173 = vld [vmem:[#allocation5 + $0x38] sm:$0xff]
    %v1174 = vld [vmem:[#allocation5 + $0x40] sm:$0xff]
    %v1175 = vld [vmem:[#allocation5 + $0x48] sm:$0xff]
    %v1176 = vld [vmem:[#allocation5 + $0x50] sm:$0xff]
    %v1177 = vld [vmem:[#allocation5 + $0x58] sm:$0xff]
    %v1178 = vld [vmem:[#allocation5 + $0x60] sm:$0xff]
    %v1179 = vld [vmem:[#allocation5 + $0x68] sm:$0xff]
    %v1180 = vld [vmem:[#allocation5 + $0x70] sm:$0xff]
    %v1181 = vld [vmem:[#allocation5 + $0x78] sm:$0xff]
    %v1182 = vld [vmem:[#allocation5 + $0x80] sm:$0xff]
    %v1183 = vld [vmem:[#allocation5 + $0x88] sm:$0xff]
    %v1184 = vld [vmem:[%s6] sm:$0xff]
    %1186 = vset.pattern.permute.xlu0 0
    %1187 = vperm.xlu0 %1186, %v1184
    %v1188 = vpop.permute.xlu0 %1187
    %v1208 = vunpack.c.l.b16 %v1166
    %v1209 = vunpack.c.h.b16 %v1166
    %v1210 = vunpack.c.l.b16 %v1167
    %v1211 = vunpack.c.h.b16 %v1167
    %v1212 = vunpack.c.l.b16 %v1168
    %v1213 = vunpack.c.h.b16 %v1168
    %v1214 = vunpack.c.l.b16 %v1169
    %v1215 = vunpack.c.h.b16 %v1169
    %v1216 = vunpack.c.l.b16 %v1170
    %v1217 = vunpack.c.h.b16 %v1170
    %v1218 = vunpack.c.l.b16 %v1171
    %v1219 = vunpack.c.h.b16 %v1171
    %v1220 = vunpack.c.l.b16 %v1172
    %v1221 = vunpack.c.h.b16 %v1172
    %v1222 = vunpack.c.l.b16 %v1173
    %v1223 = vunpack.c.h.b16 %v1173
    %v1224 = vunpack.c.l.b16 %v1174
    %v1225 = vunpack.c.h.b16 %v1174
    %v1226 = vunpack.c.l.b16 %v1175
    %v1227 = vunpack.c.h.b16 %v1175
    %v1228 = vunpack.c.l.b16 %v1176
    %v1229 = vunpack.c.h.b16 %v1176
    %v1230 = vunpack.c.l.b16 %v1177
    %v1231 = vunpack.c.h.b16 %v1177
    %v1232 = vunpack.c.l.b16 %v1178
    %v1233 = vunpack.c.h.b16 %v1178
    %v1234 = vunpack.c.l.b16 %v1179
    %v1235 = vunpack.c.h.b16 %v1179
    %v1236 = vunpack.c.l.b16 %v1180
    %v1237 = vunpack.c.h.b16 %v1180
    %v1238 = vunpack.c.l.b16 %v1181
    %v1239 = vunpack.c.h.b16 %v1181
    %v1240 = vunpack.c.l.b16 %v1182
    %v1241 = vunpack.c.h.b16 %v1182
    %v1242 = vunpack.c.l.b16 %v1183
    %v1243 = vunpack.c.h.b16 %v1183
    %v1244 = vpack.c.b16 %v1212, %v1208
    %v1245 = vpack.c.b16 %v1213, %v1209
    %v1246 = vpack.c.b16 %v1214, %v1210
    %v1247 = vpack.c.b16 %v1215, %v1211
    %v1248 = vpack.c.b16 %v1220, %v1216
    %v1249 = vpack.c.b16 %v1221, %v1217
    %v1250 = vpack.c.b16 %v1222, %v1218
    %v1251 = vpack.c.b16 %v1223, %v1219
    %v1252 = vpack.c.b16 %v1228, %v1224
    %v1253 = vpack.c.b16 %v1229, %v1225
    %v1254 = vpack.c.b16 %v1230, %v1226
    %v1255 = vpack.c.b16 %v1231, %v1227
    %v1256 = vpack.c.b16 %v1236, %v1232
    %v1257 = vpack.c.b16 %v1237, %v1233
    %v1258 = vpack.c.b16 %v1238, %v1234
    %v1259 = vpack.c.b16 %v1239, %v1235
    %v1260 = vpack.c.b16 %v1240, %v1240
    %v1261 = vpack.c.b16 %v1241, %v1241
    %v1262 = vpack.c.b16 %v1242, %v1242
    %v1263 = vpack.c.b16 %v1243, %v1243
    %v1281 = vsel %vm826, %v1165, 0
    %v1284 = vsel %vm830, %v1260, 0
    %v1287 = vsel %vm830, %v1261, 0
    %v1290 = vsel %vm830, %v1262, 0
    %v1293 = vsel %vm830, %v1263, 0
    %1295 = vmatprep.subr.bf16.mxu0 %v1245
    %1296 = vmatpush1.bf16.msra.mxu0 %v1244
    %1297 = vmatprep.subr.bf16.mxu0 %v1249
    %1298 = vmatpush1.bf16.msra.mxu0 %v1248
    %1299 = vmatprep.subr.bf16.mxu0 %v1253
    %1300 = vmatpush1.bf16.msra.mxu0 %v1252
    %1301 = vmatprep.subr.bf16.mxu0 %v1257
    %1302 = vmatpush1.bf16.msra.mxu0 %v1256
    %1303 = vmatprep.subr.bf16.mxu0 %v1287
    %1304 = vmatpush1.bf16.msra.mxu0 %v1284
    %1305 = vmatprep.subr.bf16.mxu0 0
    %1306 = vmatpush1.bf16.msra.mxu0 0
    %1307 = vmatprep.subr.bf16.mxu0 0
    %1308 = vmatpush1.bf16.msra.mxu0 0
    %1309 = vmatprep.subr.bf16.mxu0 0
    %1310 = vmatpush1.bf16.msra.mxu0 0
    %1311 = vmatprep.subr.bf16.mxu0 0
    %1312 = vmatpush1.bf16.msra.mxu0 0
    %1313 = vmatprep.subr.bf16.mxu0 0
    %1314 = vmatpush1.bf16.msra.mxu0 0
    %1315 = vmatprep.subr.bf16.mxu0 0
    %1316 = vmatpush1.bf16.msra.mxu0 0
    %1317 = vmatprep.subr.bf16.mxu0 0
    %1318 = vmatpush1.bf16.msra.mxu0 0
    %1319 = vmatprep.subr.bf16.mxu0 0
    %1320 = vmatpush1.bf16.msra.mxu0 0
    %1321 = vmatprep.subr.bf16.mxu0 0
    %1322 = vmatpush1.bf16.msra.mxu0 0
    %1323 = vmatprep.subr.bf16.mxu0 0
    %1324 = vmatpush1.bf16.msra.mxu0 0
    %1325 = vmatprep.subr.bf16.mxu0 0
    %1326 = vmatpush1.bf16.msra.mxu0 0
    %1327 = vmatprep.mubr.bf16.mxu0 0
    %1328 = vmatmul.mubr.bf16.gmra.mrb[0].mxu0 %v1281
    %v1329 = vpop.f32.mrb[0].mxu0
    %v1330 = vadd.f32 %v1188, %v1329
    %v1331 = vpop.f32.mrb[0].mxu0
    %v1332 = vadd.f32 %v1188, %v1331
    %v1333 = vpop.f32.mrb[0].mxu0
    %v1334 = vpop.f32.mrb[0].mxu0
    %1335 = vdwg.mxu0
    %1336 = vmatprep.subr.bf16.mxu0 %v1247
    %1337 = vmatpush1.bf16.msra.mxu0 %v1246
    %1338 = vmatprep.subr.bf16.mxu0 %v1251
    %1339 = vmatpush1.bf16.msra.mxu0 %v1250
    %1340 = vmatprep.subr.bf16.mxu0 %v1255
    %1341 = vmatpush1.bf16.msra.mxu0 %v1254
    %1342 = vmatprep.subr.bf16.mxu0 %v1259
    %1343 = vmatpush1.bf16.msra.mxu0 %v1258
    %1344 = vmatprep.subr.bf16.mxu0 %v1293
    %1345 = vmatpush1.bf16.msra.mxu0 %v1290
    %1346 = vmatprep.subr.bf16.mxu0 0
    %1347 = vmatpush1.bf16.msra.mxu0 0
    %1348 = vmatprep.subr.bf16.mxu0 0
    %1349 = vmatpush1.bf16.msra.mxu0 0
    %1350 = vmatprep.subr.bf16.mxu0 0
    %1351 = vmatpush1.bf16.msra.mxu0 0
    %1352 = vmatprep.subr.bf16.mxu0 0
    %1353 = vmatpush1.bf16.msra.mxu0 0
    %1354 = vmatprep.subr.bf16.mxu0 0
    %1355 = vmatpush1.bf16.msra.mxu0 0
    %1356 = vmatprep.subr.bf16.mxu0 0
    %1357 = vmatpush1.bf16.msra.mxu0 0
    %1358 = vmatprep.subr.bf16.mxu0 0
    %1359 = vmatpush1.bf16.msra.mxu0 0
    %1360 = vmatprep.subr.bf16.mxu0 0
    %1361 = vmatpush1.bf16.msra.mxu0 0
    %1362 = vmatprep.subr.bf16.mxu0 0
    %1363 = vmatpush1.bf16.msra.mxu0 0
    %1364 = vmatprep.subr.bf16.mxu0 0
    %1365 = vmatpush1.bf16.msra.mxu0 0
    %1366 = vmatprep.subr.bf16.mxu0 0
    %1367 = vmatpush1.bf16.msra.mxu0 0
    %1368 = vmatprep.mubr.bf16.mxu0 0
    %1369 = vmatmul.mubr.bf16.gmra.mrb[0].mxu0 %v1281
    %v1370 = vpop.f32.mrb[0].mxu0
    %v1371 = vadd.f32 %v1188, %v1370
    %v1372 = vpop.f32.mrb[0].mxu0
    %v1373 = vadd.f32 %v1188, %v1372
    %v1374 = vpop.f32.mrb[0].mxu0
    %v1375 = vpop.f32.mrb[0].mxu0
    %1376 = vdwg.mxu0
    %v1377 = vtanh.pop %v1330
    %v1378 = vtanh.pop %v1332
    %v1379 = vtanh.pop %v1371
    %v1380 = vtanh.pop %v1373
    %1381 = vst [vmem:[#allocation9] sm:$0xff] %v1377
    %1382 = vst [vmem:[#allocation9 + $0x8] sm:$0xff] %v1378
    %s1383 = scalar_lea.vmem [#allocation9], 16
    %1384 = vst [vmem:[%s1383] sm:$0xff] %v1379
    %1385 = vst [vmem:[%s1383 + $0x8] sm:$0xff] %v1380
    // Predicated region
    $region34: #{tpu_custom_call.1} parent=1 // pred_check
      _
    $region35: #{tpu_custom_call.1} parent=1 // pred_check_branch
      %1387 = sbr.rel (0) target = $region37
    $region36: #{tpu_custom_call.1} parent=1 // pred_region
      %s1389 = ssub.s32 512, 512
      %1390 = vsyncadd [#allocation8], %s1389
      %s1391 = sshll.u32 [#allocation9], 4
      %s1392 = int_to_ptr.vmem [resolvable:$true] %s1391
      %1397 = dma.vmem_to_hbm [thread:$0]  %s1392, 512, %s7, [#allocation8], 256, 256, 16
    $region37: #{tpu_custom_call.1} parent=1 // pred_fallthru
      _
    // Predicated region
    $region38: #{tpu_custom_call.1} parent=1 // pred_check
      _
    $region39: #{tpu_custom_call.1} parent=1 // pred_check_branch
      %1399 = sbr.rel (0) target = $region41
    $region40: #{tpu_custom_call.1} parent=1 // pred_region
      %1400 = dma.done [#allocation8], 512
    $region41: #{tpu_custom_call.1} parent=1 // pred_fallthru
      _
    %1401 = vsyncpa [#allocation7], 1
    %1402 = vsyncpa [#allocation8], 1

</llo_original>
